<compile_context>
chip_gen: v5e
topology: v5e:2x2
jax: 0.10.0
libtpu: 0.0.40
codegen_flags: <defaults>
</compile_context>

<pallas_src>
import math
from functools import partial

import jax
import jax.numpy as jnp
import numpy as np
from jax.experimental import pallas as pl
from jax.experimental.pallas import tpu as pltpu

# ------------------------- model hyper-parameters -------------------------
A_DIM = 4                      # action dim (output of vec_field)
OBS_DIM = 8                    # observation dim
INPUT_DIM = A_DIM + OBS_DIM    # MLP "input_dim" (x_input + observations)
OUTPUT_DIM = A_DIM
TIME_DIM = 32
ACTOR_HIDDEN = (64, 64)
TIME_HIDDEN = (32,)
N_STEPS = 4                    # Flow.N
P = 0.9                        # Flow.p
DTYPE = jnp.float32
AUG = 2 * A_DIM                # packed z/y state rows (= one f32 sublane tile)


# ------------------------------ Pallas kernel ------------------------------
def _flow_kernel(obs_ref, x0_ref,
                 w0z_ref, w0y_ref, w0o_ref, tproj_ref,
                 w1_ref, b1_ref,
                 w2z_ref, w2y_ref, b2z_ref, b2y_ref, mix_ref,
                 out_ref, *, n_steps, hidden_dtype):
    """Feature-major Heun integration on a packed (8, B_TILE) z/y state.

    obs_ref  : (OBS_DIM, B_TILE)                            f32
    x0_ref   : (AUG, B_TILE)  rows [0:4]=z0, [4:8]=y0       f32
    w0z_ref  : (H0, AUG)   first layer x-slice, picks z rows   (hidden dtype)
    w0y_ref  : (H0, AUG)   first layer x-slice, picks y rows   (hidden dtype)
    w0o_ref  : (H0, OBS_DIM)  first layer obs-slice            (hidden dtype)
    tproj_ref: (H0, N_STEPS)  time_mlp(t_i)@W0t + b0           f32
    w1_ref   : (H1, H0)  (hidden dtype),  b1_ref: (H1, 1) f32
    w2z_ref  : (AUG, H1)  dt*W2 in z rows, zeros in y rows     (hidden dtype)
    w2y_ref  : (AUG, H1)  dt*W2 in y rows, zeros in z rows     (hidden dtype)
    b2z_ref  : (AUG, 1)   dt*b2 in z rows (f32);  b2y_ref same for y rows
    mix_ref  : (AUG, AUG) constant p-mix matrix                f32
    out_ref  : (AUG, B_TILE)  rows [0:4]=z, [4:8]=y            f32
    """
    f32 = jnp.float32
    cdt = hidden_dtype
    bt = obs_ref.shape[1]
    h1 = w1_ref.shape[0]
    aug = b2z_ref.shape[0]

    zy = x0_ref[...]                      # packed f32 state (aug, bt)

    w0z = w0z_ref[...]
    w0y = w0y_ref[...]
    w1 = w1_ref[...]
    w2z = w2z_ref[...]
    w2y = w2y_ref[...]
    mix = mix_ref[...]

    # loop-invariant observation projection through the first layer (f32 acc)
    obs_proj = jnp.dot(w0o_ref[...], obs_ref[...].astype(cdt),
                       preferred_element_type=f32)            # (H0, bt)

    # hoist bias broadcasts out of the unrolled step loop (no CSE on
    # broadcast_in_dim)
    b1b = jnp.broadcast_to(b1_ref[...], (h1, bt))             # f32
    b2zb = jnp.broadcast_to(b2z_ref[...], (aug, bt))          # f32, dt folded
    b2yb = jnp.broadcast_to(b2y_ref[...], (aug, bt))          # f32, dt folded

    def half_step(state, w0sel, w2pad, b2pad, bias0):
        # Linear(cat([x, obs, t_emb])) with obs/t/b0 folded into bias0 and the
        # z/y input selection folded into the zero-padded w0sel.  dt and the
        # output-row selection are folded into w2pad / b2pad, so the Heun
        # half-step is one full-tile add onto the packed state (the untouched
        # half gets exactly +0).
        x = state.astype(cdt)
        h = jnp.tanh((jnp.dot(w0sel, x, preferred_element_type=f32)
                      + bias0).astype(cdt))
        h = jnp.tanh((jnp.dot(w1, h, preferred_element_type=f32)
                      + b1b).astype(cdt))
        upd = jnp.dot(w2pad, h, preferred_element_type=f32)    # (aug, bt)
        return state + upd + b2pad

    # static unroll over the (small) number of integration steps
    for i in range(n_steps):
        # column i of tproj already holds time_mlp(t_i) @ W0t + b0; one
        # broadcast-add per step, shared by both vec_field evaluations.
        bias0 = obs_proj + tproj_ref[:, i:i + 1]              # (H0, bt) f32

        zy = half_step(zy, w0y, w2z, b2zb, bias0)   # z_in = z + dt*vf(y)
        zy = half_step(zy, w0z, w2y, b2yb, bias0)   # y_in = y + dt*vf(z_in)
        # p-mix (uses updated z, as in torch) as one constant 8x8 dot
        zy = jnp.dot(mix, zy, preferred_element_type=f32)

    out_ref[...] = zy.astype(out_ref.dtype)         # unmasked lane-dense store


# ------------------------------ wrapper (glue) ------------------------------
def _device_kind():
    try:
        return jax.devices()[0].device_kind.lower()
    except Exception:
        return ""


def _pick_tile(B, num_tc, cap=512):
    """Largest multiple-of-128 tile dividing B, capped at `cap` lanes for vreg
    pressure; on multi-TC chips prefer a program count divisible by num_tc so
    every TensorCore gets balanced work.  Single-TC chips get as few grid
    programs as possible (each grid step is ~0.35 us of pure overhead)."""
    if B % 128 != 0:
        return B                                     # single (masked) tile
    divs = [t for t in range(128, min(B, cap) + 1, 128) if B % t == 0]
    if not divs:
        return B
    if num_tc > 1:
        balanced = [t for t in divs if (B // t) % num_tc == 0]
        if balanced:
            return balanced[-1]
    return divs[-1]


def _time_proj_table(params):
    """time_mlp(t_i) for all integration steps, projected through the t-slice
    of the first vec_field layer, with b0 folded in.  Plain XLA (tiny)."""
    ts = (jnp.arange(N_STEPS, dtype=DTYPE) / N_STEPS)[:, None]      # (N, 1)
    emb = ts * params['freqs']                                      # (N, half)
    wt0 = jnp.concatenate([params['wt0s'], params['wt0c']], axis=0)
    e = jnp.concatenate([jnp.sin(emb), jnp.cos(emb)], axis=-1)      # (N, TIME_DIM)
    h = jnp.tanh(e @ wt0 + params['bt0'])
    t_em = h @ params['wt1'] + params['bt1']                        # (N, TIME_DIM)
    tproj = t_em @ params['w0t'] + params['b0']                     # (N, H0)
    return tproj.T                                                  # (H0, N)


def flow_forward(obs, action_aug_0, params):
    B0 = obs.shape[0]
    kind = _device_kind()
    num_tc = 2 if "v7" in kind else 1                    # v7x: 2 TCs share grid
    # bf16 hidden path only where EUP/VPU are bf16-capable (v6e / v7x)
    cdt = jnp.bfloat16 if ("v6" in kind or "v7" in kind) else jnp.float32

    # pad batch to a lane-dense multiple of 128 (tail sliced off afterwards)
    B = B0 if B0 % 128 == 0 else ((B0 + 127) // 128) * 128
    if B != B0:
        pad = B - B0
        obs_p = jnp.concatenate([obs, jnp.zeros((pad, OBS_DIM), DTYPE)], 0)
        x0_p = jnp.concatenate([action_aug_0, jnp.zeros((pad, AUG), DTYPE)], 0)
    else:
        obs_p, x0_p = obs, action_aug_0

    B_TILE = _pick_tile(B, num_tc)
    grid = (B // B_TILE,)
    dt = 1.0 / N_STEPS

    # wrapper-side (XLA) work: time-MLP table, layout transposes, weight packs.
    tproj = _time_proj_table(params)                      # (H0, N_STEPS) f32
    obs_T = obs_p.T                                       # (OBS_DIM, B)
    x0_T = x0_p.T                                         # (AUG, B)

    w0y_T = params['w0y'].T                               # (H0, A_DIM)
    zpadc = jnp.zeros((ACTOR_HIDDEN[0], A_DIM), DTYPE)
    w0_sel_z = jnp.concatenate([w0y_T, zpadc], 1).astype(cdt)   # picks z rows
    w0_sel_y = jnp.concatenate([zpadc, w0y_T], 1).astype(cdt)   # picks y rows
    w0o_T = params['w0o'].T.astype(cdt)                   # (H0, OBS_DIM)
    w1_T = params['w1'].T.astype(cdt)                     # (H1, H0)
    b1_T = params['b1'].T                                 # (H1, 1) f32

    w2_T = params['w2'].T                                 # (A_DIM, H1)
    zpadr = jnp.zeros((A_DIM, ACTOR_HIDDEN[1]), DTYPE)
    w2pad_z = (dt * jnp.concatenate([w2_T, zpadr], 0)).astype(cdt)  # (AUG, H1)
    w2pad_y = (dt * jnp.concatenate([zpadr, w2_T], 0)).astype(cdt)
    b2_T = params['b2'].T                                 # (A_DIM, 1)
    zb = jnp.zeros((A_DIM, 1), DTYPE)
    b2pad_z = dt * jnp.concatenate([b2_T, zb], 0)         # (AUG, 1) f32
    b2pad_y = dt * jnp.concatenate([zb, b2_T], 0)

    # constant p-mix:  z' = p*z_in + (1-p)*y_in ;  y' = p*y_in + (1-p)*z'
    I4 = jnp.eye(A_DIM, dtype=DTYPE)
    mix = jnp.concatenate([
        jnp.concatenate([P * I4, (1.0 - P) * I4], 1),
        jnp.concatenate([(1.0 - P) * P * I4, (P + (1.0 - P) ** 2) * I4], 1)], 0)

    weights = [w0_sel_z, w0_sel_y, w0o_T, tproj, w1_T, b1_T,
               w2pad_z, w2pad_y, b2pad_z, b2pad_y, mix]

    def batch_spec(rows):
        return pl.BlockSpec((rows, B_TILE), lambda i: (0, i))

    def const_spec(arr):
        return pl.BlockSpec(arr.shape, lambda i: (0, 0))

    kernel = partial(_flow_kernel, n_steps=N_STEPS, hidden_dtype=cdt)
    out_T = pl.pallas_call(
        kernel,
        out_shape=jax.ShapeDtypeStruct((AUG, B), DTYPE),
        grid_spec=pltpu.PrefetchScalarGridSpec(
            num_scalar_prefetch=0,
            grid=grid,
            in_specs=([batch_spec(OBS_DIM), batch_spec(AUG)]
                      + [const_spec(w) for w in weights]),
            out_specs=batch_spec(AUG)),
        compiler_params=pltpu.CompilerParams(
            dimension_semantics=("parallel",)),
    )(obs_T, x0_T, *weights)

    # NOTE: this final transpose (and obs.T / x0.T above) is layout plumbing;
    # if the consumer accepts feature-major (AUG, B) data, return out_T[:, :B0]
    # directly and skip the non-lane-dense XLA copies at large B.
    action_aug = out_T[:, :B0].T

    # standard-normal log-prob of the initial sample (depends only on the
    # input) -> one fused XLA reduction in the wrapper, no kernel output.
    log_probs = (-0.5 * jnp.sum(action_aug_0 * action_aug_0, axis=-1)
                 - 0.5 * AUG * math.log(2.0 * math.pi))
    return action_aug, log_probs


# ---------------------- deterministic parameter setup ----------------------
def make_params(key):
    ks = jax.random.split(key, 10)

    def lin(kw, kb, fan_in, fan_out):
        bound = 1.0 / math.sqrt(fan_in)
        w = jax.random.uniform(kw, (fan_in, fan_out), DTYPE, -bound, bound)
        b = jax.random.uniform(kb, (1, fan_out), DTYPE, -bound, bound)
        return w, b

    half = TIME_DIM // 2
    freqs = jnp.exp(jnp.arange(half, dtype=DTYPE)
                    * -(math.log(10000.0) / (half - 1)))[None, :]

    # vec_field MLP:  (input_dim + t_dim) -> 64 -> 64 -> a_dim
    w0, b0 = lin(ks[0], ks[1], INPUT_DIM + TIME_DIM, ACTOR_HIDDEN[0])
    w1, b1 = lin(ks[2], ks[3], ACTOR_HIDDEN[0], ACTOR_HIDDEN[1])
    w2, b2 = lin(ks[4], ks[5], ACTOR_HIDDEN[1], OUTPUT_DIM)
    # time_mlp: SinusoidalPosEmb -> 32 -> tanh -> 32
    wt0, bt0 = lin(ks[6], ks[7], TIME_DIM, TIME_HIDDEN[0])
    wt1, bt1 = lin(ks[8], ks[9], TIME_HIDDEN[0], TIME_DIM)

    return dict(
        freqs=freqs,
        # split first vec_field layer by input block: [x (a_dim) | obs | t_emb]
        w0y=w0[:A_DIM], w0o=w0[A_DIM:A_DIM + OBS_DIM], w0t=w0[A_DIM + OBS_DIM:],
        b0=b0, w1=w1, b1=b1, w2=w2, b2=b2,
        # split first time_mlp layer by input block: [sin | cos]
        wt0s=wt0[:half], wt0c=wt0[half:], bt0=bt0, wt1=wt1, bt1=bt1)


# ------------------------- pure-JAX reference model -------------------------
def ref_forward(obs, action_aug_0, params):
    z = action_aug_0[:, :A_DIM]
    y = action_aug_0[:, A_DIM:]
    dt = 1.0 / N_STEPS
    W0 = jnp.concatenate([params['w0y'], params['w0o'], params['w0t']], axis=0)
    Wt0 = jnp.concatenate([params['wt0s'], params['wt0c']], axis=0)

    def time_mlp(t):
        emb = t * params['freqs']
        e = jnp.concatenate([jnp.sin(emb), jnp.cos(emb)], axis=-1)
        h = jnp.tanh(e @ Wt0 + params['bt0'])
        return h @ params['wt1'] + params['bt1']

    def vf(x_in, t_em):
        inp = jnp.concatenate(
            [x_in, obs, jnp.broadcast_to(t_em, (x_in.shape[0], TIME_DIM))], axis=1)
        h = jnp.tanh(inp @ W0 + params['b0'])
        h = jnp.tanh(h @ params['w1'] + params['b1'])
        return h @ params['w2'] + params['b2']

    for i in range(N_STEPS):
        t_em = time_mlp(float(i) / N_STEPS)
        z_in = z + vf(y, t_em) * dt
        y_in = y + vf(z_in, t_em) * dt
        z = P * z_in + (1.0 - P) * y_in
        y = P * y_in + (1.0 - P) * z

    action_aug = jnp.concatenate([z, y], axis=-1)
    lp = (-0.5 * jnp.sum(action_aug_0 ** 2, axis=-1)
          - 0.5 * action_aug_0.shape[-1] * math.log(2.0 * math.pi))
    return action_aug, lp


# ----------------------------------- main -----------------------------------
if __name__ == "__main__":
    key = jax.random.PRNGKey(0)
    k_params, k_obs, k_x0 = jax.random.split(key, 3)
    params = make_params(k_params)

    B = 256
    observations = jax.random.normal(k_obs, (B, OBS_DIM), DTYPE)
    # torch.randn(num_envs, 2*a_dim) in Flow.forward -> sampled here in JAX
    action_aug_0 = jax.random.normal(k_x0, (B, AUG), DTYPE)

    action_aug, log_probs = flow_forward(observations, action_aug_0, params)
    jax.block_until_ready((action_aug, log_probs))

    ref_a, ref_lp = ref_forward(observations, action_aug_0, params)
    assert np.allclose(np.asarray(action_aug), np.asarray(ref_a),
                       atol=5e-2, rtol=5e-2), "action_aug mismatch"
    assert np.allclose(np.asarray(log_probs), np.asarray(ref_lp),
                       atol=5e-2, rtol=5e-2), "log_probs mismatch"
    print("KERNEL_OK")
</pallas_src>

<mosaic_0001>
module attributes {stable_mosaic.version = 11 : i64} {
  func.func @_flow_kernel(%arg0: i32, %arg1: memref<8x256xf32, #tpu.memory_space<vmem>>, %arg2: memref<8x256xf32, #tpu.memory_space<vmem>>, %arg3: memref<64x8xf32, #tpu.memory_space<vmem>>, %arg4: memref<64x8xf32, #tpu.memory_space<vmem>>, %arg5: memref<64x8xf32, #tpu.memory_space<vmem>>, %arg6: memref<64x4xf32, #tpu.memory_space<vmem>>, %arg7: memref<64x64xf32, #tpu.memory_space<vmem>>, %arg8: memref<64x1xf32, #tpu.memory_space<vmem>>, %arg9: memref<8x64xf32, #tpu.memory_space<vmem>>, %arg10: memref<8x64xf32, #tpu.memory_space<vmem>>, %arg11: memref<8x1xf32, #tpu.memory_space<vmem>>, %arg12: memref<8x1xf32, #tpu.memory_space<vmem>>, %arg13: memref<8x8xf32, #tpu.memory_space<vmem>>, %arg14: memref<8x256xf32, #tpu.memory_space<vmem>>) attributes {dimension_semantics = [#tpu.dimension_semantics<parallel>], iteration_bounds = array<i64: 1>, scalar_prefetch = 0 : i64, scratch_operands = 0 : i64, tpu.core_type = #tpu.core_type<tc>, window_params = [{transform_indices = @transform_0, window_bounds = array<i64: 8, 256>}, {transform_indices = @transform_1, window_bounds = array<i64: 8, 256>}, {pipeline_mode = #tpu.pipeline_mode<synchronous>, transform_indices = @transform_2, window_bounds = array<i64: 64, 8>}, {pipeline_mode = #tpu.pipeline_mode<synchronous>, transform_indices = @transform_3, window_bounds = array<i64: 64, 8>}, {pipeline_mode = #tpu.pipeline_mode<synchronous>, transform_indices = @transform_4, window_bounds = array<i64: 64, 8>}, {pipeline_mode = #tpu.pipeline_mode<synchronous>, transform_indices = @transform_5, window_bounds = array<i64: 64, 4>}, {pipeline_mode = #tpu.pipeline_mode<synchronous>, transform_indices = @transform_6, window_bounds = array<i64: 64, 64>}, {pipeline_mode = #tpu.pipeline_mode<synchronous>, transform_indices = @transform_7, window_bounds = array<i64: 64, 1>}, {pipeline_mode = #tpu.pipeline_mode<synchronous>, transform_indices = @transform_8, window_bounds = array<i64: 8, 64>}, {pipeline_mode = #tpu.pipeline_mode<synchronous>, transform_indices = @transform_9, window_bounds = array<i64: 8, 64>}, {pipeline_mode = #tpu.pipeline_mode<synchronous>, transform_indices = @transform_10, window_bounds = array<i64: 8, 1>}, {pipeline_mode = #tpu.pipeline_mode<synchronous>, transform_indices = @transform_11, window_bounds = array<i64: 8, 1>}, {pipeline_mode = #tpu.pipeline_mode<synchronous>, transform_indices = @transform_12, window_bounds = array<i64: 8, 8>}, {transform_indices = @transform_13, window_bounds = array<i64: 8, 256>}]} {
    %c0 = arith.constant 0 : index
    %c0_0 = arith.constant 0 : index
    %0 = vector.load %arg2[%c0, %c0_0] : memref<8x256xf32, #tpu.memory_space<vmem>>, vector<8x256xf32>
    %c0_1 = arith.constant 0 : index
    %c0_2 = arith.constant 0 : index
    %1 = vector.load %arg3[%c0_1, %c0_2] : memref<64x8xf32, #tpu.memory_space<vmem>>, vector<64x8xf32>
    %c0_3 = arith.constant 0 : index
    %c0_4 = arith.constant 0 : index
    %2 = vector.load %arg4[%c0_3, %c0_4] : memref<64x8xf32, #tpu.memory_space<vmem>>, vector<64x8xf32>
    %c0_5 = arith.constant 0 : index
    %c0_6 = arith.constant 0 : index
    %3 = vector.load %arg7[%c0_5, %c0_6] : memref<64x64xf32, #tpu.memory_space<vmem>>, vector<64x64xf32>
    %c0_7 = arith.constant 0 : index
    %c0_8 = arith.constant 0 : index
    %4 = vector.load %arg9[%c0_7, %c0_8] : memref<8x64xf32, #tpu.memory_space<vmem>>, vector<8x64xf32>
    %c0_9 = arith.constant 0 : index
    %c0_10 = arith.constant 0 : index
    %5 = vector.load %arg10[%c0_9, %c0_10] : memref<8x64xf32, #tpu.memory_space<vmem>>, vector<8x64xf32>
    %c0_11 = arith.constant 0 : index
    %c0_12 = arith.constant 0 : index
    %6 = vector.load %arg13[%c0_11, %c0_12] : memref<8x8xf32, #tpu.memory_space<vmem>>, vector<8x8xf32>
    %c0_13 = arith.constant 0 : index
    %c0_14 = arith.constant 0 : index
    %7 = vector.load %arg5[%c0_13, %c0_14] : memref<64x8xf32, #tpu.memory_space<vmem>>, vector<64x8xf32>
    %c0_15 = arith.constant 0 : index
    %c0_16 = arith.constant 0 : index
    %8 = vector.load %arg1[%c0_15, %c0_16] : memref<8x256xf32, #tpu.memory_space<vmem>>, vector<8x256xf32>
    %cst = arith.constant dense<0.000000e+00> : vector<64x256xf32>
    %9 = tpu.matmul %7, %8, %cst {dimension_numbers = #tpu.dot_dimension_numbers<[1], [0], [0], [1], [0, 0, 1, 1], [], []>} : vector<64x8xf32>, vector<8x256xf32>, vector<64x256xf32> -> vector<64x256xf32>
    %c0_17 = arith.constant 0 : index
    %c0_18 = arith.constant 0 : index
    %10 = vector.load %arg8[%c0_17, %c0_18] : memref<64x1xf32, #tpu.memory_space<vmem>>, vector<64x1xf32>
    %11 = vector.shape_cast %10 : vector<64x1xf32> to vector<64x1xf32>
    %12 = vector.broadcast %11 : vector<64x1xf32> to vector<64x256xf32>
    %c0_19 = arith.constant 0 : index
    %c0_20 = arith.constant 0 : index
    %13 = vector.load %arg11[%c0_19, %c0_20] : memref<8x1xf32, #tpu.memory_space<vmem>>, vector<8x1xf32>
    %14 = vector.shape_cast %13 : vector<8x1xf32> to vector<8x1xf32>
    %15 = vector.broadcast %14 : vector<8x1xf32> to vector<8x256xf32>
    %c0_21 = arith.constant 0 : index
    %c0_22 = arith.constant 0 : index
    %16 = vector.load %arg12[%c0_21, %c0_22] : memref<8x1xf32, #tpu.memory_space<vmem>>, vector<8x1xf32>
    %17 = vector.shape_cast %16 : vector<8x1xf32> to vector<8x1xf32>
    %18 = vector.broadcast %17 : vector<8x1xf32> to vector<8x256xf32>
    %c0_23 = arith.constant 0 : index
    %c0_24 = arith.constant 0 : index
    %19 = vector.load %arg6[%c0_23, %c0_24] : memref<64x4xf32, #tpu.memory_space<vmem>>, vector<64x1xf32>
    %20 = vector.broadcast %19 : vector<64x1xf32> to vector<64x256xf32>
    %21 = arith.addf %9, %20 : vector<64x256xf32>
    %cst_25 = arith.constant dense<0.000000e+00> : vector<64x256xf32>
    %22 = tpu.matmul %2, %0, %cst_25 {dimension_numbers = #tpu.dot_dimension_numbers<[1], [0], [0], [1], [0, 0, 1, 1], [], []>} : vector<64x8xf32>, vector<8x256xf32>, vector<64x256xf32> -> vector<64x256xf32>
    %23 = arith.addf %22, %21 : vector<64x256xf32>
    %24 = math.tanh %23 : vector<64x256xf32>
    %cst_26 = arith.constant dense<0.000000e+00> : vector<64x256xf32>
    %25 = tpu.matmul %3, %24, %cst_26 {dimension_numbers = #tpu.dot_dimension_numbers<[1], [0], [0], [1], [0, 0, 1, 1], [], []>} : vector<64x64xf32>, vector<64x256xf32>, vector<64x256xf32> -> vector<64x256xf32>
    %26 = arith.addf %25, %12 : vector<64x256xf32>
    %27 = math.tanh %26 : vector<64x256xf32>
    %cst_27 = arith.constant dense<0.000000e+00> : vector<8x256xf32>
    %28 = tpu.matmul %4, %27, %cst_27 {dimension_numbers = #tpu.dot_dimension_numbers<[1], [0], [0], [1], [0, 0, 1, 1], [], []>} : vector<8x64xf32>, vector<64x256xf32>, vector<8x256xf32> -> vector<8x256xf32>
    %29 = arith.addf %0, %28 : vector<8x256xf32>
    %30 = arith.addf %29, %15 : vector<8x256xf32>
    %cst_28 = arith.constant dense<0.000000e+00> : vector<64x256xf32>
    %31 = tpu.matmul %1, %30, %cst_28 {dimension_numbers = #tpu.dot_dimension_numbers<[1], [0], [0], [1], [0, 0, 1, 1], [], []>} : vector<64x8xf32>, vector<8x256xf32>, vector<64x256xf32> -> vector<64x256xf32>
    %32 = arith.addf %31, %21 : vector<64x256xf32>
    %33 = math.tanh %32 : vector<64x256xf32>
    %cst_29 = arith.constant dense<0.000000e+00> : vector<64x256xf32>
    %34 = tpu.matmul %3, %33, %cst_29 {dimension_numbers = #tpu.dot_dimension_numbers<[1], [0], [0], [1], [0, 0, 1, 1], [], []>} : vector<64x64xf32>, vector<64x256xf32>, vector<64x256xf32> -> vector<64x256xf32>
    %35 = arith.addf %34, %12 : vector<64x256xf32>
    %36 = math.tanh %35 : vector<64x256xf32>
    %cst_30 = arith.constant dense<0.000000e+00> : vector<8x256xf32>
    %37 = tpu.matmul %5, %36, %cst_30 {dimension_numbers = #tpu.dot_dimension_numbers<[1], [0], [0], [1], [0, 0, 1, 1], [], []>} : vector<8x64xf32>, vector<64x256xf32>, vector<8x256xf32> -> vector<8x256xf32>
    %38 = arith.addf %30, %37 : vector<8x256xf32>
    %39 = arith.addf %38, %18 : vector<8x256xf32>
    %cst_31 = arith.constant dense<0.000000e+00> : vector<8x256xf32>
    %40 = tpu.matmul %6, %39, %cst_31 {dimension_numbers = #tpu.dot_dimension_numbers<[1], [0], [0], [1], [0, 0, 1, 1], [], []>} : vector<8x8xf32>, vector<8x256xf32>, vector<8x256xf32> -> vector<8x256xf32>
    %c0_32 = arith.constant 0 : index
    %c1 = arith.constant 1 : index
    %41 = vector.load %arg6[%c0_32, %c1] : memref<64x4xf32, #tpu.memory_space<vmem>>, vector<64x1xf32>
    %42 = vector.broadcast %41 : vector<64x1xf32> to vector<64x256xf32>
    %43 = arith.addf %9, %42 : vector<64x256xf32>
    %cst_33 = arith.constant dense<0.000000e+00> : vector<64x256xf32>
    %44 = tpu.matmul %2, %40, %cst_33 {dimension_numbers = #tpu.dot_dimension_numbers<[1], [0], [0], [1], [0, 0, 1, 1], [], []>} : vector<64x8xf32>, vector<8x256xf32>, vector<64x256xf32> -> vector<64x256xf32>
    %45 = arith.addf %44, %43 : vector<64x256xf32>
    %46 = math.tanh %45 : vector<64x256xf32>
    %cst_34 = arith.constant dense<0.000000e+00> : vector<64x256xf32>
    %47 = tpu.matmul %3, %46, %cst_34 {dimension_numbers = #tpu.dot_dimension_numbers<[1], [0], [0], [1], [0, 0, 1, 1], [], []>} : vector<64x64xf32>, vector<64x256xf32>, vector<64x256xf32> -> vector<64x256xf32>
    %48 = arith.addf %47, %12 : vector<64x256xf32>
    %49 = math.tanh %48 : vector<64x256xf32>
    %cst_35 = arith.constant dense<0.000000e+00> : vector<8x256xf32>
    %50 = tpu.matmul %4, %49, %cst_35 {dimension_numbers = #tpu.dot_dimension_numbers<[1], [0], [0], [1], [0, 0, 1, 1], [], []>} : vector<8x64xf32>, vector<64x256xf32>, vector<8x256xf32> -> vector<8x256xf32>
    %51 = arith.addf %40, %50 : vector<8x256xf32>
    %52 = arith.addf %51, %15 : vector<8x256xf32>
    %cst_36 = arith.constant dense<0.000000e+00> : vector<64x256xf32>
    %53 = tpu.matmul %1, %52, %cst_36 {dimension_numbers = #tpu.dot_dimension_numbers<[1], [0], [0], [1], [0, 0, 1, 1], [], []>} : vector<64x8xf32>, vector<8x256xf32>, vector<64x256xf32> -> vector<64x256xf32>
    %54 = arith.addf %53, %43 : vector<64x256xf32>
    %55 = math.tanh %54 : vector<64x256xf32>
    %cst_37 = arith.constant dense<0.000000e+00> : vector<64x256xf32>
    %56 = tpu.matmul %3, %55, %cst_37 {dimension_numbers = #tpu.dot_dimension_numbers<[1], [0], [0], [1], [0, 0, 1, 1], [], []>} : vector<64x64xf32>, vector<64x256xf32>, vector<64x256xf32> -> vector<64x256xf32>
    %57 = arith.addf %56, %12 : vector<64x256xf32>
    %58 = math.tanh %57 : vector<64x256xf32>
    %cst_38 = arith.constant dense<0.000000e+00> : vector<8x256xf32>
    %59 = tpu.matmul %5, %58, %cst_38 {dimension_numbers = #tpu.dot_dimension_numbers<[1], [0], [0], [1], [0, 0, 1, 1], [], []>} : vector<8x64xf32>, vector<64x256xf32>, vector<8x256xf32> -> vector<8x256xf32>
    %60 = arith.addf %52, %59 : vector<8x256xf32>
    %61 = arith.addf %60, %18 : vector<8x256xf32>
    %cst_39 = arith.constant dense<0.000000e+00> : vector<8x256xf32>
    %62 = tpu.matmul %6, %61, %cst_39 {dimension_numbers = #tpu.dot_dimension_numbers<[1], [0], [0], [1], [0, 0, 1, 1], [], []>} : vector<8x8xf32>, vector<8x256xf32>, vector<8x256xf32> -> vector<8x256xf32>
    %c0_40 = arith.constant 0 : index
    %c2 = arith.constant 2 : index
    %63 = vector.load %arg6[%c0_40, %c2] : memref<64x4xf32, #tpu.memory_space<vmem>>, vector<64x1xf32>
    %64 = vector.broadcast %63 : vector<64x1xf32> to vector<64x256xf32>
    %65 = arith.addf %9, %64 : vector<64x256xf32>
    %cst_41 = arith.constant dense<0.000000e+00> : vector<64x256xf32>
    %66 = tpu.matmul %2, %62, %cst_41 {dimension_numbers = #tpu.dot_dimension_numbers<[1], [0], [0], [1], [0, 0, 1, 1], [], []>} : vector<64x8xf32>, vector<8x256xf32>, vector<64x256xf32> -> vector<64x256xf32>
    %67 = arith.addf %66, %65 : vector<64x256xf32>
    %68 = math.tanh %67 : vector<64x256xf32>
    %cst_42 = arith.constant dense<0.000000e+00> : vector<64x256xf32>
    %69 = tpu.matmul %3, %68, %cst_42 {dimension_numbers = #tpu.dot_dimension_numbers<[1], [0], [0], [1], [0, 0, 1, 1], [], []>} : vector<64x64xf32>, vector<64x256xf32>, vector<64x256xf32> -> vector<64x256xf32>
    %70 = arith.addf %69, %12 : vector<64x256xf32>
    %71 = math.tanh %70 : vector<64x256xf32>
    %cst_43 = arith.constant dense<0.000000e+00> : vector<8x256xf32>
    %72 = tpu.matmul %4, %71, %cst_43 {dimension_numbers = #tpu.dot_dimension_numbers<[1], [0], [0], [1], [0, 0, 1, 1], [], []>} : vector<8x64xf32>, vector<64x256xf32>, vector<8x256xf32> -> vector<8x256xf32>
    %73 = arith.addf %62, %72 : vector<8x256xf32>
    %74 = arith.addf %73, %15 : vector<8x256xf32>
    %cst_44 = arith.constant dense<0.000000e+00> : vector<64x256xf32>
    %75 = tpu.matmul %1, %74, %cst_44 {dimension_numbers = #tpu.dot_dimension_numbers<[1], [0], [0], [1], [0, 0, 1, 1], [], []>} : vector<64x8xf32>, vector<8x256xf32>, vector<64x256xf32> -> vector<64x256xf32>
    %76 = arith.addf %75, %65 : vector<64x256xf32>
    %77 = math.tanh %76 : vector<64x256xf32>
    %cst_45 = arith.constant dense<0.000000e+00> : vector<64x256xf32>
    %78 = tpu.matmul %3, %77, %cst_45 {dimension_numbers = #tpu.dot_dimension_numbers<[1], [0], [0], [1], [0, 0, 1, 1], [], []>} : vector<64x64xf32>, vector<64x256xf32>, vector<64x256xf32> -> vector<64x256xf32>
    %79 = arith.addf %78, %12 : vector<64x256xf32>
    %80 = math.tanh %79 : vector<64x256xf32>
    %cst_46 = arith.constant dense<0.000000e+00> : vector<8x256xf32>
    %81 = tpu.matmul %5, %80, %cst_46 {dimension_numbers = #tpu.dot_dimension_numbers<[1], [0], [0], [1], [0, 0, 1, 1], [], []>} : vector<8x64xf32>, vector<64x256xf32>, vector<8x256xf32> -> vector<8x256xf32>
    %82 = arith.addf %74, %81 : vector<8x256xf32>
    %83 = arith.addf %82, %18 : vector<8x256xf32>
    %cst_47 = arith.constant dense<0.000000e+00> : vector<8x256xf32>
    %84 = tpu.matmul %6, %83, %cst_47 {dimension_numbers = #tpu.dot_dimension_numbers<[1], [0], [0], [1], [0, 0, 1, 1], [], []>} : vector<8x8xf32>, vector<8x256xf32>, vector<8x256xf32> -> vector<8x256xf32>
    %c0_48 = arith.constant 0 : index
    %c3 = arith.constant 3 : index
    %85 = vector.load %arg6[%c0_48, %c3] : memref<64x4xf32, #tpu.memory_space<vmem>>, vector<64x1xf32>
    %86 = vector.broadcast %85 : vector<64x1xf32> to vector<64x256xf32>
    %87 = arith.addf %9, %86 : vector<64x256xf32>
    %cst_49 = arith.constant dense<0.000000e+00> : vector<64x256xf32>
    %88 = tpu.matmul %2, %84, %cst_49 {dimension_numbers = #tpu.dot_dimension_numbers<[1], [0], [0], [1], [0, 0, 1, 1], [], []>} : vector<64x8xf32>, vector<8x256xf32>, vector<64x256xf32> -> vector<64x256xf32>
    %89 = arith.addf %88, %87 : vector<64x256xf32>
    %90 = math.tanh %89 : vector<64x256xf32>
    %cst_50 = arith.constant dense<0.000000e+00> : vector<64x256xf32>
    %91 = tpu.matmul %3, %90, %cst_50 {dimension_numbers = #tpu.dot_dimension_numbers<[1], [0], [0], [1], [0, 0, 1, 1], [], []>} : vector<64x64xf32>, vector<64x256xf32>, vector<64x256xf32> -> vector<64x256xf32>
    %92 = arith.addf %91, %12 : vector<64x256xf32>
    %93 = math.tanh %92 : vector<64x256xf32>
    %cst_51 = arith.constant dense<0.000000e+00> : vector<8x256xf32>
    %94 = tpu.matmul %4, %93, %cst_51 {dimension_numbers = #tpu.dot_dimension_numbers<[1], [0], [0], [1], [0, 0, 1, 1], [], []>} : vector<8x64xf32>, vector<64x256xf32>, vector<8x256xf32> -> vector<8x256xf32>
    %95 = arith.addf %84, %94 : vector<8x256xf32>
    %96 = arith.addf %95, %15 : vector<8x256xf32>
    %cst_52 = arith.constant dense<0.000000e+00> : vector<64x256xf32>
    %97 = tpu.matmul %1, %96, %cst_52 {dimension_numbers = #tpu.dot_dimension_numbers<[1], [0], [0], [1], [0, 0, 1, 1], [], []>} : vector<64x8xf32>, vector<8x256xf32>, vector<64x256xf32> -> vector<64x256xf32>
    %98 = arith.addf %97, %87 : vector<64x256xf32>
    %99 = math.tanh %98 : vector<64x256xf32>
    %cst_53 = arith.constant dense<0.000000e+00> : vector<64x256xf32>
    %100 = tpu.matmul %3, %99, %cst_53 {dimension_numbers = #tpu.dot_dimension_numbers<[1], [0], [0], [1], [0, 0, 1, 1], [], []>} : vector<64x64xf32>, vector<64x256xf32>, vector<64x256xf32> -> vector<64x256xf32>
    %101 = arith.addf %100, %12 : vector<64x256xf32>
    %102 = math.tanh %101 : vector<64x256xf32>
    %cst_54 = arith.constant dense<0.000000e+00> : vector<8x256xf32>
    %103 = tpu.matmul %5, %102, %cst_54 {dimension_numbers = #tpu.dot_dimension_numbers<[1], [0], [0], [1], [0, 0, 1, 1], [], []>} : vector<8x64xf32>, vector<64x256xf32>, vector<8x256xf32> -> vector<8x256xf32>
    %104 = arith.addf %96, %103 : vector<8x256xf32>
    %105 = arith.addf %104, %18 : vector<8x256xf32>
    %cst_55 = arith.constant dense<0.000000e+00> : vector<8x256xf32>
    %106 = tpu.matmul %6, %105, %cst_55 {dimension_numbers = #tpu.dot_dimension_numbers<[1], [0], [0], [1], [0, 0, 1, 1], [], []>} : vector<8x8xf32>, vector<8x256xf32>, vector<8x256xf32> -> vector<8x256xf32>
    %c0_56 = arith.constant 0 : index
    %c0_57 = arith.constant 0 : index
    %107 = vector.load %arg14[%c0_56, %c0_57] : memref<8x256xf32, #tpu.memory_space<vmem>>, vector<8x256xf32>
    tpu.vector_store %arg14[%c0_56, %c0_57], %106 {strides = array<i32>} : memref<8x256xf32, #tpu.memory_space<vmem>>, vector<8x256xf32>,
    return
  }
  func.func @transform_0(%arg0: i32) -> (i32, i32) {
    %c0_i32 = arith.constant 0 : i32
    %c0_i32_0 = arith.constant 0 : i32
    return %c0_i32, %arg0 : i32, i32
  }
  func.func @transform_1(%arg0: i32) -> (i32, i32) {
    %c0_i32 = arith.constant 0 : i32
    %c0_i32_0 = arith.constant 0 : i32
    return %c0_i32, %arg0 : i32, i32
  }
  func.func @transform_2(%arg0: i32) -> (i32, i32) {
    %c0_i32 = arith.constant 0 : i32
    %c0_i32_0 = arith.constant 0 : i32
    %c0_i32_1 = arith.constant 0 : i32
    return %c0_i32, %c0_i32_0 : i32, i32
  }
  func.func @transform_3(%arg0: i32) -> (i32, i32) {
    %c0_i32 = arith.constant 0 : i32
    %c0_i32_0 = arith.constant 0 : i32
    %c0_i32_1 = arith.constant 0 : i32
    return %c0_i32, %c0_i32_0 : i32, i32
  }
  func.func @transform_4(%arg0: i32) -> (i32, i32) {
    %c0_i32 = arith.constant 0 : i32
    %c0_i32_0 = arith.constant 0 : i32
    %c0_i32_1 = arith.constant 0 : i32
    return %c0_i32, %c0_i32_0 : i32, i32
  }
  func.func @transform_5(%arg0: i32) -> (i32, i32) {
    %c0_i32 = arith.constant 0 : i32
    %c0_i32_0 = arith.constant 0 : i32
    %c0_i32_1 = arith.constant 0 : i32
    return %c0_i32, %c0_i32_0 : i32, i32
  }
  func.func @transform_6(%arg0: i32) -> (i32, i32) {
    %c0_i32 = arith.constant 0 : i32
    %c0_i32_0 = arith.constant 0 : i32
    %c0_i32_1 = arith.constant 0 : i32
    return %c0_i32, %c0_i32_0 : i32, i32
  }
  func.func @transform_7(%arg0: i32) -> (i32, i32) {
    %c0_i32 = arith.constant 0 : i32
    %c0_i32_0 = arith.constant 0 : i32
    %c0_i32_1 = arith.constant 0 : i32
    return %c0_i32, %c0_i32_0 : i32, i32
  }
  func.func @transform_8(%arg0: i32) -> (i32, i32) {
    %c0_i32 = arith.constant 0 : i32
    %c0_i32_0 = arith.constant 0 : i32
    %c0_i32_1 = arith.constant 0 : i32
    return %c0_i32, %c0_i32_0 : i32, i32
  }
  func.func @transform_9(%arg0: i32) -> (i32, i32) {
    %c0_i32 = arith.constant 0 : i32
    %c0_i32_0 = arith.constant 0 : i32
    %c0_i32_1 = arith.constant 0 : i32
    return %c0_i32, %c0_i32_0 : i32, i32
  }
  func.func @transform_10(%arg0: i32) -> (i32, i32) {
    %c0_i32 = arith.constant 0 : i32
    %c0_i32_0 = arith.constant 0 : i32
    %c0_i32_1 = arith.constant 0 : i32
    return %c0_i32, %c0_i32_0 : i32, i32
  }
  func.func @transform_11(%arg0: i32) -> (i32, i32) {
    %c0_i32 = arith.constant 0 : i32
    %c0_i32_0 = arith.constant 0 : i32
    %c0_i32_1 = arith.constant 0 : i32
    return %c0_i32, %c0_i32_0 : i32, i32
  }
  func.func @transform_12(%arg0: i32) -> (i32, i32) {
    %c0_i32 = arith.constant 0 : i32
    %c0_i32_0 = arith.constant 0 : i32
    %c0_i32_1 = arith.constant 0 : i32
    return %c0_i32, %c0_i32_0 : i32, i32
  }
  func.func @transform_13(%arg0: i32) -> (i32, i32) {
    %c0_i32 = arith.constant 0 : i32
    %c0_i32_0 = arith.constant 0 : i32
    return %c0_i32, %arg0 : i32, i32
  }
}

</mosaic_0001>

<llo_original>
// kernel: tpu_custom_call.1
$region0: #{tpu_custom_call.1}
  #allocation0 [shape = 'u32[]', space=smem, size = 0x4, offset = 0x4, fixed_abs, tag = 'smem constant byte address 0x4 - core index']
  #allocation1 [shape = 'u32[72,128]{1,0:T(1,128)}', space=vmem, size = 0x9000, scoped, tag = 'internal scratch']
  %s0 = inlined_call_operand.vmem [shape: f32[8,256], index: 0, kind: input, shape index: {}]
  %s1 = inlined_call_operand.vmem [shape: f32[8,256], index: 1, kind: input, shape index: {}]
  %s2 = inlined_call_operand.vmem [shape: f32[64,8], index: 2, kind: input, shape index: {}]
  %s3 = inlined_call_operand.vmem [shape: f32[64,8], index: 3, kind: input, shape index: {}]
  %s4 = inlined_call_operand.vmem [shape: f32[64,8], index: 4, kind: input, shape index: {}]
  %s5 = inlined_call_operand.vmem [shape: f32[64,4], index: 5, kind: input, shape index: {}]
  %s6 = inlined_call_operand.vmem [shape: f32[64,64], index: 6, kind: input, shape index: {}]
  %s7 = inlined_call_operand.vmem [shape: f32[64,1], index: 7, kind: input, shape index: {}]
  %s8 = inlined_call_operand.vmem [shape: f32[8,64], index: 8, kind: input, shape index: {}]
  %s9 = inlined_call_operand.vmem [shape: f32[8,64], index: 9, kind: input, shape index: {}]
  %s10 = inlined_call_operand.vmem [shape: f32[8,1], index: 10, kind: input, shape index: {}]
  %s11 = inlined_call_operand.vmem [shape: f32[8,1], index: 11, kind: input, shape index: {}]
  %s12 = inlined_call_operand.vmem [shape: f32[8,8], index: 12, kind: input, shape index: {}]
  %s13 = inlined_call_operand.hbm [shape: f32[8,256], index: 13, kind: output, shape index: {}]
  %s14 = sld [smem:[#allocation0]]
  $region62: #{tpu_custom_call.1} parent=0
    _
  %s16 = ssub.s32 1, %s14
  %s17 = scalar_select 0, %s16, %s14
  $region1: #{tpu_custom_call.1} parent=0
    #allocation2 [shape = 'u8[8192]{0}', space=vmem, size = 0x2000, scoped, tag = 'output window, operand 0, single buffered']
    #allocation3 [shape = 's32[1]{0}', space=sflag, size = 0x4, scoped, tag = 'scoped memory for tpu_custom_call.1']
    %18 = vsyncpa [#allocation3], 0
    // Predicated region
    $region2: #{tpu_custom_call.1} parent=1 // pred_check
      _
    $region3: #{tpu_custom_call.1} parent=1 // pred_check_branch
      %20 = sbr.rel (0) target = $region5
    $region4: #{tpu_custom_call.1} parent=1 // pred_region
      _
    $region5: #{tpu_custom_call.1} parent=1 // pred_fallthru
      _
    // Predicated region
    $region6: #{tpu_custom_call.1} parent=1 // pred_check
      _
    $region7: #{tpu_custom_call.1} parent=1 // pred_check_branch
      %22 = sbr.rel (0) target = $region9
    $region8: #{tpu_custom_call.1} parent=1 // pred_region
      _
    $region9: #{tpu_custom_call.1} parent=1 // pred_fallthru
      _
    // Predicated region
    $region10: #{tpu_custom_call.1} parent=1 // pred_check
      _
    $region11: #{tpu_custom_call.1} parent=1 // pred_check_branch
      %24 = sbr.rel (0) target = $region13
    $region12: #{tpu_custom_call.1} parent=1 // pred_region
      _
    $region13: #{tpu_custom_call.1} parent=1 // pred_fallthru
      _
    // Predicated region
    $region14: #{tpu_custom_call.1} parent=1 // pred_check
      _
    $region15: #{tpu_custom_call.1} parent=1 // pred_check_branch
      %26 = sbr.rel (0) target = $region17
    $region16: #{tpu_custom_call.1} parent=1 // pred_region
      _
    $region17: #{tpu_custom_call.1} parent=1 // pred_fallthru
      _
    // Predicated region
    $region18: #{tpu_custom_call.1} parent=1 // pred_check
      _
    $region19: #{tpu_custom_call.1} parent=1 // pred_check_branch
      %28 = sbr.rel (0) target = $region21
    $region20: #{tpu_custom_call.1} parent=1 // pred_region
      _
    $region21: #{tpu_custom_call.1} parent=1 // pred_fallthru
      _
    // Predicated region
    $region22: #{tpu_custom_call.1} parent=1 // pred_check
      _
    $region23: #{tpu_custom_call.1} parent=1 // pred_check_branch
      %30 = sbr.rel (0) target = $region25
    $region24: #{tpu_custom_call.1} parent=1 // pred_region
      _
    $region25: #{tpu_custom_call.1} parent=1 // pred_fallthru
      _
    // Predicated region
    $region26: #{tpu_custom_call.1} parent=1 // pred_check
      _
    $region27: #{tpu_custom_call.1} parent=1 // pred_check_branch
      %32 = sbr.rel (0) target = $region29
    $region28: #{tpu_custom_call.1} parent=1 // pred_region
      _
    $region29: #{tpu_custom_call.1} parent=1 // pred_fallthru
      _
    // Predicated region
    $region30: #{tpu_custom_call.1} parent=1 // pred_check
      _
    $region31: #{tpu_custom_call.1} parent=1 // pred_check_branch
      %34 = sbr.rel (0) target = $region33
    $region32: #{tpu_custom_call.1} parent=1 // pred_region
      _
    $region33: #{tpu_custom_call.1} parent=1 // pred_fallthru
      _
    // Predicated region
    $region34: #{tpu_custom_call.1} parent=1 // pred_check
      _
    $region35: #{tpu_custom_call.1} parent=1 // pred_check_branch
      %36 = sbr.rel (0) target = $region37
    $region36: #{tpu_custom_call.1} parent=1 // pred_region
      _
    $region37: #{tpu_custom_call.1} parent=1 // pred_fallthru
      _
    // Predicated region
    $region38: #{tpu_custom_call.1} parent=1 // pred_check
      _
    $region39: #{tpu_custom_call.1} parent=1 // pred_check_branch
      %38 = sbr.rel (0) target = $region41
    $region40: #{tpu_custom_call.1} parent=1 // pred_region
      _
    $region41: #{tpu_custom_call.1} parent=1 // pred_fallthru
      _
    // Predicated region
    $region42: #{tpu_custom_call.1} parent=1 // pred_check
      _
    $region43: #{tpu_custom_call.1} parent=1 // pred_check_branch
      %40 = sbr.rel (0) target = $region45
    $region44: #{tpu_custom_call.1} parent=1 // pred_region
      _
    $region45: #{tpu_custom_call.1} parent=1 // pred_fallthru
      _
    // Predicated region
    $region46: #{tpu_custom_call.1} parent=1 // pred_check
      _
    $region47: #{tpu_custom_call.1} parent=1 // pred_check_branch
      %42 = sbr.rel (0) target = $region49
    $region48: #{tpu_custom_call.1} parent=1 // pred_region
      _
    $region49: #{tpu_custom_call.1} parent=1 // pred_fallthru
      _
    // Predicated region
    $region50: #{tpu_custom_call.1} parent=1 // pred_check
      _
    $region51: #{tpu_custom_call.1} parent=1 // pred_check_branch
      %44 = sbr.rel (0) target = $region53
    $region52: #{tpu_custom_call.1} parent=1 // pred_region
      _
    $region53: #{tpu_custom_call.1} parent=1 // pred_fallthru
      _
    %v45 = vld [vmem:[%s1] sm:$0xff]
    %v46 = vld [vmem:[%s1 + $0x8] sm:$0xff]
    %v47 = vld [vmem:[%s2] sm:$0xff]
    %v48 = vld [vmem:[%s2 + $0x8] sm:$0xff]
    %v49 = vld [vmem:[%s2 + $0x10] sm:$0xff]
    %v50 = vld [vmem:[%s2 + $0x18] sm:$0xff]
    %v51 = vld [vmem:[%s2 + $0x20] sm:$0xff]
    %v52 = vld [vmem:[%s2 + $0x28] sm:$0xff]
    %v53 = vld [vmem:[%s2 + $0x30] sm:$0xff]
    %v54 = vld [vmem:[%s2 + $0x38] sm:$0xff]
    %v55 = vld [vmem:[%s3] sm:$0xff]
    %v56 = vld [vmem:[%s3 + $0x8] sm:$0xff]
    %v57 = vld [vmem:[%s3 + $0x10] sm:$0xff]
    %v58 = vld [vmem:[%s3 + $0x18] sm:$0xff]
    %v59 = vld [vmem:[%s3 + $0x20] sm:$0xff]
    %v60 = vld [vmem:[%s3 + $0x28] sm:$0xff]
    %v61 = vld [vmem:[%s3 + $0x30] sm:$0xff]
    %v62 = vld [vmem:[%s3 + $0x38] sm:$0xff]
    %v63 = vld [vmem:[%s6] sm:$0xff]
    %v64 = vld [vmem:[%s6 + $0x8] sm:$0xff]
    %v65 = vld [vmem:[%s6 + $0x10] sm:$0xff]
    %v66 = vld [vmem:[%s6 + $0x18] sm:$0xff]
    %v67 = vld [vmem:[%s6 + $0x20] sm:$0xff]
    %v68 = vld [vmem:[%s6 + $0x28] sm:$0xff]
    %v69 = vld [vmem:[%s6 + $0x30] sm:$0xff]
    %v70 = vld [vmem:[%s6 + $0x38] sm:$0xff]
    %v71 = vld [vmem:[%s8] sm:$0xff]
    %v72 = vld [vmem:[%s9] sm:$0xff]
    %v73 = vld [vmem:[%s12] sm:$0xff]
    %v74 = vld [vmem:[%s4] sm:$0xff]
    %v75 = vld [vmem:[%s4 + $0x8] sm:$0xff]
    %v76 = vld [vmem:[%s4 + $0x10] sm:$0xff]
    %v77 = vld [vmem:[%s4 + $0x18] sm:$0xff]
    %v78 = vld [vmem:[%s4 + $0x20] sm:$0xff]
    %v79 = vld [vmem:[%s4 + $0x28] sm:$0xff]
    %v80 = vld [vmem:[%s4 + $0x30] sm:$0xff]
    %v81 = vld [vmem:[%s4 + $0x38] sm:$0xff]
    %v82 = vld [vmem:[%s0] sm:$0xff]
    %v83 = vld [vmem:[%s0 + $0x8] sm:$0xff]
    %vm84 = vcmask 64512
    %v86 = vsel %vm84, %v74, 0
    %v89 = vsel %vm84, %v75, 0
    %v92 = vsel %vm84, %v76, 0
    %v95 = vsel %vm84, %v77, 0
    %v98 = vsel %vm84, %v78, 0
    %v101 = vsel %vm84, %v79, 0
    %v104 = vsel %vm84, %v80, 0
    %v107 = vsel %vm84, %v81, 0
    %109 = vmatpush.msra.mxu0 0.0
    %110 = vmatpush.msra.mxu0 0.0
    %111 = vmatpush.msra.mxu0 0.0
    %112 = vmatpush.msra.mxu0 0.0
    %113 = vmatpush.msra.mxu0 0.0
    %114 = vmatpush.msra.mxu0 0.0
    %115 = vmatpush.msra.mxu0 0.0
    %116 = vmatpush.msra.mxu0 0.0
    %117 = vmatpush.msra.mxu0 0.0
    %118 = vmatpush.msra.mxu0 0.0
    %119 = vmatpush.msra.mxu0 0.0
    %120 = vmatpush.msra.mxu0 0.0
    %121 = vmatpush.msra.mxu0 0.0
    %122 = vmatpush.msra.mxu0 0.0
    %123 = vmatpush.msra.mxu0 0.0
    %124 = vmatpush.msra.mxu0 %v82
    %125 = vmatmul.f32.gmra.mxu0 %v86
    %v126 = vpop.f32.mrf.mxu0
    %v127 = vadd.f32 0.0, %v126
    %128 = vmatmul.f32.gmra.mxu0 %v89
    %v129 = vpop.f32.mrf.mxu0
    %v130 = vadd.f32 0.0, %v129
    %131 = vmatmul.f32.gmra.mxu0 %v92
    %v132 = vpop.f32.mrf.mxu0
    %v133 = vadd.f32 0.0, %v132
    %134 = vmatmul.f32.gmra.mxu0 %v95
    %v135 = vpop.f32.mrf.mxu0
    %v136 = vadd.f32 0.0, %v135
    %137 = vmatmul.f32.gmra.mxu0 %v98
    %v138 = vpop.f32.mrf.mxu0
    %v139 = vadd.f32 0.0, %v138
    %140 = vmatmul.f32.gmra.mxu0 %v101
    %v141 = vpop.f32.mrf.mxu0
    %v142 = vadd.f32 0.0, %v141
    %143 = vmatmul.f32.gmra.mxu0 %v104
    %v144 = vpop.f32.mrf.mxu0
    %v145 = vadd.f32 0.0, %v144
    %146 = vmatmul.f32.gmra.mxu0 %v107
    %v147 = vpop.f32.mrf.mxu0
    %v148 = vadd.f32 0.0, %v147
    %149 = vdwg.mxu0
    %150 = vmatpush.msra.mxu0 0.0
    %151 = vmatpush.msra.mxu0 0.0
    %152 = vmatpush.msra.mxu0 0.0
    %153 = vmatpush.msra.mxu0 0.0
    %154 = vmatpush.msra.mxu0 0.0
    %155 = vmatpush.msra.mxu0 0.0
    %156 = vmatpush.msra.mxu0 0.0
    %157 = vmatpush.msra.mxu0 0.0
    %158 = vmatpush.msra.mxu0 0.0
    %159 = vmatpush.msra.mxu0 0.0
    %160 = vmatpush.msra.mxu0 0.0
    %161 = vmatpush.msra.mxu0 0.0
    %162 = vmatpush.msra.mxu0 0.0
    %163 = vmatpush.msra.mxu0 0.0
    %164 = vmatpush.msra.mxu0 0.0
    %165 = vmatpush.msra.mxu0 %v83
    %166 = vmatmul.f32.gmra.mxu0 %v86
    %v167 = vpop.f32.mrf.mxu0
    %v168 = vadd.f32 0.0, %v167
    %169 = vmatmul.f32.gmra.mxu0 %v89
    %v170 = vpop.f32.mrf.mxu0
    %v171 = vadd.f32 0.0, %v170
    %172 = vmatmul.f32.gmra.mxu0 %v92
    %v173 = vpop.f32.mrf.mxu0
    %v174 = vadd.f32 0.0, %v173
    %175 = vmatmul.f32.gmra.mxu0 %v95
    %v176 = vpop.f32.mrf.mxu0
    %v177 = vadd.f32 0.0, %v176
    %178 = vmatmul.f32.gmra.mxu0 %v98
    %v179 = vpop.f32.mrf.mxu0
    %v180 = vadd.f32 0.0, %v179
    %181 = vmatmul.f32.gmra.mxu0 %v101
    %v182 = vpop.f32.mrf.mxu0
    %v183 = vadd.f32 0.0, %v182
    %184 = vmatmul.f32.gmra.mxu0 %v104
    %v185 = vpop.f32.mrf.mxu0
    %v186 = vadd.f32 0.0, %v185
    %187 = vmatmul.f32.gmra.mxu0 %v107
    %v188 = vpop.f32.mrf.mxu0
    %v189 = vadd.f32 0.0, %v188
    %190 = vdwg.mxu0
    %v191 = vld [vmem:[%s7] sm:$0xff]
    %v192 = vld [vmem:[%s7 + $0x8] sm:$0xff]
    %v193 = vld [vmem:[%s7 + $0x10] sm:$0xff]
    %v194 = vld [vmem:[%s7 + $0x18] sm:$0xff]
    %v195 = vld [vmem:[%s7 + $0x20] sm:$0xff]
    %v196 = vld [vmem:[%s7 + $0x28] sm:$0xff]
    %v197 = vld [vmem:[%s7 + $0x30] sm:$0xff]
    %v198 = vld [vmem:[%s7 + $0x38] sm:$0xff]
    %200 = vset.pattern.permute.xlu0 0
    %201 = vperm.xlu0 %200, %v191
    %v202 = vpop.permute.xlu0 %201
    %205 = vset.pattern.permute.xlu0 0
    %206 = vperm.xlu0 %205, %v192
    %v207 = vpop.permute.xlu0 %206
    %210 = vset.pattern.permute.xlu0 0
    %211 = vperm.xlu0 %210, %v193
    %v212 = vpop.permute.xlu0 %211
    %215 = vset.pattern.permute.xlu0 0
    %216 = vperm.xlu0 %215, %v194
    %v217 = vpop.permute.xlu0 %216
    %220 = vset.pattern.permute.xlu0 0
    %221 = vperm.xlu0 %220, %v195
    %v222 = vpop.permute.xlu0 %221
    %225 = vset.pattern.permute.xlu0 0
    %226 = vperm.xlu0 %225, %v196
    %v227 = vpop.permute.xlu0 %226
    %230 = vset.pattern.permute.xlu0 0
    %231 = vperm.xlu0 %230, %v197
    %v232 = vpop.permute.xlu0 %231
    %235 = vset.pattern.permute.xlu0 0
    %236 = vperm.xlu0 %235, %v198
    %v237 = vpop.permute.xlu0 %236
    %v239 = vld [vmem:[%s10] sm:$0xff]
    %241 = vset.pattern.permute.xlu0 0
    %242 = vperm.xlu0 %241, %v239
    %v243 = vpop.permute.xlu0 %242
    %v245 = vld [vmem:[%s11] sm:$0xff]
    %247 = vset.pattern.permute.xlu0 0
    %248 = vperm.xlu0 %247, %v245
    %v249 = vpop.permute.xlu0 %248
    %v251 = vld [vmem:[%s5] sm:$0xff]
    %v252 = vld [vmem:[%s5 + $0x8] sm:$0xff]
    %v253 = vld [vmem:[%s5 + $0x10] sm:$0xff]
    %v254 = vld [vmem:[%s5 + $0x18] sm:$0xff]
    %v255 = vld [vmem:[%s5 + $0x20] sm:$0xff]
    %v256 = vld [vmem:[%s5 + $0x28] sm:$0xff]
    %v257 = vld [vmem:[%s5 + $0x30] sm:$0xff]
    %v258 = vld [vmem:[%s5 + $0x38] sm:$0xff]
    %260 = vset.pattern.permute.xlu0 0
    %261 = vperm.xlu0 %260, %v251
    %v262 = vpop.permute.xlu0 %261
    %265 = vset.pattern.permute.xlu0 0
    %266 = vperm.xlu0 %265, %v252
    %v267 = vpop.permute.xlu0 %266
    %270 = vset.pattern.permute.xlu0 0
    %271 = vperm.xlu0 %270, %v253
    %v272 = vpop.permute.xlu0 %271
    %275 = vset.pattern.permute.xlu0 0
    %276 = vperm.xlu0 %275, %v254
    %v277 = vpop.permute.xlu0 %276
    %280 = vset.pattern.permute.xlu0 0
    %281 = vperm.xlu0 %280, %v255
    %v282 = vpop.permute.xlu0 %281
    %285 = vset.pattern.permute.xlu0 0
    %286 = vperm.xlu0 %285, %v256
    %v287 = vpop.permute.xlu0 %286
    %290 = vset.pattern.permute.xlu0 0
    %291 = vperm.xlu0 %290, %v257
    %v292 = vpop.permute.xlu0 %291
    %295 = vset.pattern.permute.xlu0 0
    %296 = vperm.xlu0 %295, %v258
    %v297 = vpop.permute.xlu0 %296
    %v299 = vadd.f32 %v127, %v262
    %v300 = vadd.f32 %v168, %v262
    %v301 = vadd.f32 %v130, %v267
    %v302 = vadd.f32 %v171, %v267
    %v303 = vadd.f32 %v133, %v272
    %v304 = vadd.f32 %v174, %v272
    %v305 = vadd.f32 %v136, %v277
    %v306 = vadd.f32 %v177, %v277
    %v307 = vadd.f32 %v139, %v282
    %v308 = vadd.f32 %v180, %v282
    %v309 = vadd.f32 %v142, %v287
    %v310 = vadd.f32 %v183, %v287
    %v311 = vadd.f32 %v145, %v292
    %v312 = vadd.f32 %v186, %v292
    %v313 = vadd.f32 %v148, %v297
    %v314 = vadd.f32 %v189, %v297
    %v316 = vsel %vm84, %v55, 0
    %v319 = vsel %vm84, %v56, 0
    %v322 = vsel %vm84, %v57, 0
    %v325 = vsel %vm84, %v58, 0
    %v328 = vsel %vm84, %v59, 0
    %v331 = vsel %vm84, %v60, 0
    %v334 = vsel %vm84, %v61, 0
    %v337 = vsel %vm84, %v62, 0
    %339 = vmatpush.msra.mxu0 0.0
    %340 = vmatpush.msra.mxu0 0.0
    %341 = vmatpush.msra.mxu0 0.0
    %342 = vmatpush.msra.mxu0 0.0
    %343 = vmatpush.msra.mxu0 0.0
    %344 = vmatpush.msra.mxu0 0.0
    %345 = vmatpush.msra.mxu0 0.0
    %346 = vmatpush.msra.mxu0 0.0
    %347 = vmatpush.msra.mxu0 0.0
    %348 = vmatpush.msra.mxu0 0.0
    %349 = vmatpush.msra.mxu0 0.0
    %350 = vmatpush.msra.mxu0 0.0
    %351 = vmatpush.msra.mxu0 0.0
    %352 = vmatpush.msra.mxu0 0.0
    %353 = vmatpush.msra.mxu0 0.0
    %354 = vmatpush.msra.mxu0 %v45
    %355 = vmatmul.f32.gmra.mxu0 %v316
    %v356 = vpop.f32.mrf.mxu0
    %v357 = vadd.f32 %v299, %v356
    %358 = vmatmul.f32.gmra.mxu0 %v319
    %v359 = vpop.f32.mrf.mxu0
    %v360 = vadd.f32 %v301, %v359
    %361 = vmatmul.f32.gmra.mxu0 %v322
    %v362 = vpop.f32.mrf.mxu0
    %v363 = vadd.f32 %v303, %v362
    %364 = vmatmul.f32.gmra.mxu0 %v325
    %v365 = vpop.f32.mrf.mxu0
    %v366 = vadd.f32 %v305, %v365
    %367 = vmatmul.f32.gmra.mxu0 %v328
    %v368 = vpop.f32.mrf.mxu0
    %v369 = vadd.f32 %v307, %v368
    %370 = vmatmul.f32.gmra.mxu0 %v331
    %v371 = vpop.f32.mrf.mxu0
    %v372 = vadd.f32 %v309, %v371
    %373 = vmatmul.f32.gmra.mxu0 %v334
    %v374 = vpop.f32.mrf.mxu0
    %v375 = vadd.f32 %v311, %v374
    %376 = vmatmul.f32.gmra.mxu0 %v337
    %v377 = vpop.f32.mrf.mxu0
    %v378 = vadd.f32 %v313, %v377
    %379 = vdwg.mxu0
    %380 = vmatpush.msra.mxu0 0.0
    %381 = vmatpush.msra.mxu0 0.0
    %382 = vmatpush.msra.mxu0 0.0
    %383 = vmatpush.msra.mxu0 0.0
    %384 = vmatpush.msra.mxu0 0.0
    %385 = vmatpush.msra.mxu0 0.0
    %386 = vmatpush.msra.mxu0 0.0
    %387 = vmatpush.msra.mxu0 0.0
    %388 = vmatpush.msra.mxu0 0.0
    %389 = vmatpush.msra.mxu0 0.0
    %390 = vmatpush.msra.mxu0 0.0
    %391 = vmatpush.msra.mxu0 0.0
    %392 = vmatpush.msra.mxu0 0.0
    %393 = vmatpush.msra.mxu0 0.0
    %394 = vmatpush.msra.mxu0 0.0
    %395 = vmatpush.msra.mxu0 %v46
    %396 = vmatmul.f32.gmra.mxu0 %v316
    %v397 = vpop.f32.mrf.mxu0
    %v398 = vadd.f32 %v300, %v397
    %399 = vmatmul.f32.gmra.mxu0 %v319
    %v400 = vpop.f32.mrf.mxu0
    %v401 = vadd.f32 %v302, %v400
    %402 = vmatmul.f32.gmra.mxu0 %v322
    %v403 = vpop.f32.mrf.mxu0
    %v404 = vadd.f32 %v304, %v403
    %405 = vmatmul.f32.gmra.mxu0 %v325
    %v406 = vpop.f32.mrf.mxu0
    %v407 = vadd.f32 %v306, %v406
    %408 = vmatmul.f32.gmra.mxu0 %v328
    %v409 = vpop.f32.mrf.mxu0
    %v410 = vadd.f32 %v308, %v409
    %411 = vmatmul.f32.gmra.mxu0 %v331
    %v412 = vpop.f32.mrf.mxu0
    %v413 = vadd.f32 %v310, %v412
    %414 = vmatmul.f32.gmra.mxu0 %v334
    %v415 = vpop.f32.mrf.mxu0
    %v416 = vadd.f32 %v312, %v415
    %417 = vmatmul.f32.gmra.mxu0 %v337
    %v418 = vpop.f32.mrf.mxu0
    %v419 = vadd.f32 %v314, %v418
    %420 = vdwg.mxu0
    %v421 = vtanh.pop %v357
    %v422 = vtanh.pop %v398
    %v423 = vtanh.pop %v360
    %v424 = vtanh.pop %v401
    %v425 = vtanh.pop %v363
    %v426 = vtanh.pop %v404
    %v427 = vtanh.pop %v366
    %v428 = vtanh.pop %v407
    %v429 = vtanh.pop %v369
    %v430 = vtanh.pop %v410
    %v431 = vtanh.pop %v372
    %v432 = vtanh.pop %v413
    %v433 = vtanh.pop %v375
    %v434 = vtanh.pop %v416
    %v435 = vtanh.pop %v378
    %v436 = vtanh.pop %v419
    %vm437 = vcmask 523264
    %v439 = vsel %vm437, %v63, 0
    %v442 = vsel %vm437, %v64, 0
    %v445 = vsel %vm437, %v65, 0
    %v448 = vsel %vm437, %v66, 0
    %v451 = vsel %vm437, %v67, 0
    %v454 = vsel %vm437, %v68, 0
    %v457 = vsel %vm437, %v69, 0
    %v460 = vsel %vm437, %v70, 0
    %462 = vmatpush.msra.mxu0 0.0
    %463 = vmatpush.msra.mxu0 0.0
    %464 = vmatpush.msra.mxu0 0.0
    %465 = vmatpush.msra.mxu0 0.0
    %466 = vmatpush.msra.mxu0 0.0
    %467 = vmatpush.msra.mxu0 0.0
    %468 = vmatpush.msra.mxu0 0.0
    %469 = vmatpush.msra.mxu0 0.0
    %470 = vmatpush.msra.mxu0 %v435
    %471 = vmatpush.msra.mxu0 %v433
    %472 = vmatpush.msra.mxu0 %v431
    %473 = vmatpush.msra.mxu0 %v429
    %474 = vmatpush.msra.mxu0 %v427
    %475 = vmatpush.msra.mxu0 %v425
    %476 = vmatpush.msra.mxu0 %v423
    %477 = vmatpush.msra.mxu0 %v421
    %478 = vmatmul.f32.gmra.mxu0 %v439
    %v479 = vpop.f32.mrf.mxu0
    %v480 = vadd.f32 %v202, %v479
    %481 = vmatmul.f32.gmra.mxu0 %v442
    %v482 = vpop.f32.mrf.mxu0
    %v483 = vadd.f32 %v207, %v482
    %484 = vmatmul.f32.gmra.mxu0 %v445
    %v485 = vpop.f32.mrf.mxu0
    %v486 = vadd.f32 %v212, %v485
    %487 = vmatmul.f32.gmra.mxu0 %v448
    %v488 = vpop.f32.mrf.mxu0
    %v489 = vadd.f32 %v217, %v488
    %490 = vmatmul.f32.gmra.mxu0 %v451
    %v491 = vpop.f32.mrf.mxu0
    %v492 = vadd.f32 %v222, %v491
    %493 = vmatmul.f32.gmra.mxu0 %v454
    %v494 = vpop.f32.mrf.mxu0
    %v495 = vadd.f32 %v227, %v494
    %496 = vmatmul.f32.gmra.mxu0 %v457
    %v497 = vpop.f32.mrf.mxu0
    %v498 = vadd.f32 %v232, %v497
    %499 = vmatmul.f32.gmra.mxu0 %v460
    %v500 = vpop.f32.mrf.mxu0
    %v501 = vadd.f32 %v237, %v500
    %502 = vdwg.mxu0
    %503 = vmatpush.msra.mxu0 0.0
    %504 = vmatpush.msra.mxu0 0.0
    %505 = vmatpush.msra.mxu0 0.0
    %506 = vmatpush.msra.mxu0 0.0
    %507 = vmatpush.msra.mxu0 0.0
    %508 = vmatpush.msra.mxu0 0.0
    %509 = vmatpush.msra.mxu0 0.0
    %510 = vmatpush.msra.mxu0 0.0
    %511 = vmatpush.msra.mxu0 %v436
    %512 = vmatpush.msra.mxu0 %v434
    %513 = vmatpush.msra.mxu0 %v432
    %514 = vmatpush.msra.mxu0 %v430
    %515 = vmatpush.msra.mxu0 %v428
    %516 = vmatpush.msra.mxu0 %v426
    %517 = vmatpush.msra.mxu0 %v424
    %518 = vmatpush.msra.mxu0 %v422
    %519 = vmatmul.f32.gmra.mxu0 %v439
    %v520 = vpop.f32.mrf.mxu0
    %v521 = vadd.f32 %v202, %v520
    %522 = vmatmul.f32.gmra.mxu0 %v442
    %v523 = vpop.f32.mrf.mxu0
    %v524 = vadd.f32 %v207, %v523
    %525 = vmatmul.f32.gmra.mxu0 %v445
    %v526 = vpop.f32.mrf.mxu0
    %v527 = vadd.f32 %v212, %v526
    %528 = vmatmul.f32.gmra.mxu0 %v448
    %v529 = vpop.f32.mrf.mxu0
    %v530 = vadd.f32 %v217, %v529
    %531 = vmatmul.f32.gmra.mxu0 %v451
    %v532 = vpop.f32.mrf.mxu0
    %v533 = vadd.f32 %v222, %v532
    %534 = vmatmul.f32.gmra.mxu0 %v454
    %v535 = vpop.f32.mrf.mxu0
    %v536 = vadd.f32 %v227, %v535
    %537 = vmatmul.f32.gmra.mxu0 %v457
    %v538 = vpop.f32.mrf.mxu0
    %v539 = vadd.f32 %v232, %v538
    %540 = vmatmul.f32.gmra.mxu0 %v460
    %v541 = vpop.f32.mrf.mxu0
    %v542 = vadd.f32 %v237, %v541
    %543 = vdwg.mxu0
    %v544 = vtanh.pop %v480
    %v545 = vtanh.pop %v521
    %v546 = vtanh.pop %v483
    %v547 = vtanh.pop %v524
    %v548 = vtanh.pop %v486
    %v549 = vtanh.pop %v527
    %v550 = vtanh.pop %v489
    %v551 = vtanh.pop %v530
    %v552 = vtanh.pop %v492
    %v553 = vtanh.pop %v533
    %v554 = vtanh.pop %v495
    %v555 = vtanh.pop %v536
    %v556 = vtanh.pop %v498
    %v557 = vtanh.pop %v539
    %v558 = vtanh.pop %v501
    %v559 = vtanh.pop %v542
    %v561 = vsel %vm437, %v71, 0
    %563 = vmatpush.msra.mxu0 0.0
    %564 = vmatpush.msra.mxu0 0.0
    %565 = vmatpush.msra.mxu0 0.0
    %566 = vmatpush.msra.mxu0 0.0
    %567 = vmatpush.msra.mxu0 0.0
    %568 = vmatpush.msra.mxu0 0.0
    %569 = vmatpush.msra.mxu0 0.0
    %570 = vmatpush.msra.mxu0 0.0
    %571 = vmatpush.msra.mxu0 %v558
    %572 = vmatpush.msra.mxu0 %v556
    %573 = vmatpush.msra.mxu0 %v554
    %574 = vmatpush.msra.mxu0 %v552
    %575 = vmatpush.msra.mxu0 %v550
    %576 = vmatpush.msra.mxu0 %v548
    %577 = vmatpush.msra.mxu0 %v546
    %578 = vmatpush.msra.mxu0 %v544
    %579 = vmatmul.f32.gmra.mxu0 %v561
    %v580 = vpop.f32.mrf.mxu0
    %v581 = vadd.f32 0.0, %v580
    %582 = vdwg.mxu0
    %583 = vmatpush.msra.mxu0 0.0
    %584 = vmatpush.msra.mxu0 0.0
    %585 = vmatpush.msra.mxu0 0.0
    %586 = vmatpush.msra.mxu0 0.0
    %587 = vmatpush.msra.mxu0 0.0
    %588 = vmatpush.msra.mxu0 0.0
    %589 = vmatpush.msra.mxu0 0.0
    %590 = vmatpush.msra.mxu0 0.0
    %591 = vmatpush.msra.mxu0 %v559
    %592 = vmatpush.msra.mxu0 %v557
    %593 = vmatpush.msra.mxu0 %v555
    %594 = vmatpush.msra.mxu0 %v553
    %595 = vmatpush.msra.mxu0 %v551
    %596 = vmatpush.msra.mxu0 %v549
    %597 = vmatpush.msra.mxu0 %v547
    %598 = vmatpush.msra.mxu0 %v545
    %599 = vmatmul.f32.gmra.mxu0 %v561
    %v600 = vpop.f32.mrf.mxu0
    %v601 = vadd.f32 0.0, %v600
    %602 = vdwg.mxu0
    %v603 = vadd.f32 %v45, %v581
    %v604 = vadd.f32 %v46, %v601
    %v605 = vadd.f32 %v603, %v243
    %v606 = vadd.f32 %v604, %v243
    %v608 = vsel %vm84, %v47, 0
    %v611 = vsel %vm84, %v48, 0
    %v614 = vsel %vm84, %v49, 0
    %v617 = vsel %vm84, %v50, 0
    %v620 = vsel %vm84, %v51, 0
    %v623 = vsel %vm84, %v52, 0
    %v626 = vsel %vm84, %v53, 0
    %v629 = vsel %vm84, %v54, 0
    %631 = vmatpush.msra.mxu0 0.0
    %632 = vmatpush.msra.mxu0 0.0
    %633 = vmatpush.msra.mxu0 0.0
    %634 = vmatpush.msra.mxu0 0.0
    %635 = vmatpush.msra.mxu0 0.0
    %636 = vmatpush.msra.mxu0 0.0
    %637 = vmatpush.msra.mxu0 0.0
    %638 = vmatpush.msra.mxu0 0.0
    %639 = vmatpush.msra.mxu0 0.0
    %640 = vmatpush.msra.mxu0 0.0
    %641 = vmatpush.msra.mxu0 0.0
    %642 = vmatpush.msra.mxu0 0.0
    %643 = vmatpush.msra.mxu0 0.0
    %644 = vmatpush.msra.mxu0 0.0
    %645 = vmatpush.msra.mxu0 0.0
    %646 = vmatpush.msra.mxu0 %v605
    %647 = vmatmul.f32.gmra.mxu0 %v608
    %v648 = vpop.f32.mrf.mxu0
    %v649 = vadd.f32 %v299, %v648
    %650 = vmatmul.f32.gmra.mxu0 %v611
    %v651 = vpop.f32.mrf.mxu0
    %v652 = vadd.f32 %v301, %v651
    %653 = vmatmul.f32.gmra.mxu0 %v614
    %v654 = vpop.f32.mrf.mxu0
    %v655 = vadd.f32 %v303, %v654
    %656 = vmatmul.f32.gmra.mxu0 %v617
    %v657 = vpop.f32.mrf.mxu0
    %v658 = vadd.f32 %v305, %v657
    %659 = vmatmul.f32.gmra.mxu0 %v620
    %v660 = vpop.f32.mrf.mxu0
    %v661 = vadd.f32 %v307, %v660
    %662 = vmatmul.f32.gmra.mxu0 %v623
    %v663 = vpop.f32.mrf.mxu0
    %v664 = vadd.f32 %v309, %v663
    %665 = vmatmul.f32.gmra.mxu0 %v626
    %v666 = vpop.f32.mrf.mxu0
    %v667 = vadd.f32 %v311, %v666
    %668 = vmatmul.f32.gmra.mxu0 %v629
    %v669 = vpop.f32.mrf.mxu0
    %v670 = vadd.f32 %v313, %v669
    %671 = vdwg.mxu0
    %672 = vmatpush.msra.mxu0 0.0
    %673 = vmatpush.msra.mxu0 0.0
    %674 = vmatpush.msra.mxu0 0.0
    %675 = vmatpush.msra.mxu0 0.0
    %676 = vmatpush.msra.mxu0 0.0
    %677 = vmatpush.msra.mxu0 0.0
    %678 = vmatpush.msra.mxu0 0.0
    %679 = vmatpush.msra.mxu0 0.0
    %680 = vmatpush.msra.mxu0 0.0
    %681 = vmatpush.msra.mxu0 0.0
    %682 = vmatpush.msra.mxu0 0.0
    %683 = vmatpush.msra.mxu0 0.0
    %684 = vmatpush.msra.mxu0 0.0
    %685 = vmatpush.msra.mxu0 0.0
    %686 = vmatpush.msra.mxu0 0.0
    %687 = vmatpush.msra.mxu0 %v606
    %688 = vmatmul.f32.gmra.mxu0 %v608
    %v689 = vpop.f32.mrf.mxu0
    %v690 = vadd.f32 %v300, %v689
    %691 = vmatmul.f32.gmra.mxu0 %v611
    %v692 = vpop.f32.mrf.mxu0
    %v693 = vadd.f32 %v302, %v692
    %694 = vmatmul.f32.gmra.mxu0 %v614
    %v695 = vpop.f32.mrf.mxu0
    %v696 = vadd.f32 %v304, %v695
    %697 = vmatmul.f32.gmra.mxu0 %v617
    %v698 = vpop.f32.mrf.mxu0
    %v699 = vadd.f32 %v306, %v698
    %700 = vmatmul.f32.gmra.mxu0 %v620
    %v701 = vpop.f32.mrf.mxu0
    %v702 = vadd.f32 %v308, %v701
    %703 = vmatmul.f32.gmra.mxu0 %v623
    %v704 = vpop.f32.mrf.mxu0
    %v705 = vadd.f32 %v310, %v704
    %706 = vmatmul.f32.gmra.mxu0 %v626
    %v707 = vpop.f32.mrf.mxu0
    %v708 = vadd.f32 %v312, %v707
    %709 = vmatmul.f32.gmra.mxu0 %v629
    %v710 = vpop.f32.mrf.mxu0
    %v711 = vadd.f32 %v314, %v710
    %712 = vdwg.mxu0
    %v713 = vtanh.pop %v649
    %v714 = vtanh.pop %v690
    %v715 = vtanh.pop %v652
    %v716 = vtanh.pop %v693
    %v717 = vtanh.pop %v655
    %v718 = vtanh.pop %v696
    %v719 = vtanh.pop %v658
    %v720 = vtanh.pop %v699
    %v721 = vtanh.pop %v661
    %v722 = vtanh.pop %v702
    %v723 = vtanh.pop %v664
    %v724 = vtanh.pop %v705
    %v725 = vtanh.pop %v667
    %v726 = vtanh.pop %v708
    %v727 = vtanh.pop %v670
    %v728 = vtanh.pop %v711
    %729 = vmatpush.msra.mxu0 0.0
    %730 = vmatpush.msra.mxu0 0.0
    %731 = vmatpush.msra.mxu0 0.0
    %732 = vmatpush.msra.mxu0 0.0
    %733 = vmatpush.msra.mxu0 0.0
    %734 = vmatpush.msra.mxu0 0.0
    %735 = vmatpush.msra.mxu0 0.0
    %736 = vmatpush.msra.mxu0 0.0
    %737 = vmatpush.msra.mxu0 %v727
    %738 = vmatpush.msra.mxu0 %v725
    %739 = vmatpush.msra.mxu0 %v723
    %740 = vmatpush.msra.mxu0 %v721
    %741 = vmatpush.msra.mxu0 %v719
    %742 = vmatpush.msra.mxu0 %v717
    %743 = vmatpush.msra.mxu0 %v715
    %744 = vmatpush.msra.mxu0 %v713
    %745 = vmatmul.f32.gmra.mxu0 %v439
    %v746 = vpop.f32.mrf.mxu0
    %v747 = vadd.f32 %v202, %v746
    %748 = vmatmul.f32.gmra.mxu0 %v442
    %v749 = vpop.f32.mrf.mxu0
    %v750 = vadd.f32 %v207, %v749
    %751 = vmatmul.f32.gmra.mxu0 %v445
    %v752 = vpop.f32.mrf.mxu0
    %v753 = vadd.f32 %v212, %v752
    %754 = vmatmul.f32.gmra.mxu0 %v448
    %v755 = vpop.f32.mrf.mxu0
    %v756 = vadd.f32 %v217, %v755
    %757 = vmatmul.f32.gmra.mxu0 %v451
    %v758 = vpop.f32.mrf.mxu0
    %v759 = vadd.f32 %v222, %v758
    %760 = vmatmul.f32.gmra.mxu0 %v454
    %v761 = vpop.f32.mrf.mxu0
    %v762 = vadd.f32 %v227, %v761
    %763 = vmatmul.f32.gmra.mxu0 %v457
    %v764 = vpop.f32.mrf.mxu0
    %v765 = vadd.f32 %v232, %v764
    %766 = vmatmul.f32.gmra.mxu0 %v460
    %v767 = vpop.f32.mrf.mxu0
    %v768 = vadd.f32 %v237, %v767
    %769 = vdwg.mxu0
    %770 = vmatpush.msra.mxu0 0.0
    %771 = vmatpush.msra.mxu0 0.0
    %772 = vmatpush.msra.mxu0 0.0
    %773 = vmatpush.msra.mxu0 0.0
    %774 = vmatpush.msra.mxu0 0.0
    %775 = vmatpush.msra.mxu0 0.0
    %776 = vmatpush.msra.mxu0 0.0
    %777 = vmatpush.msra.mxu0 0.0
    %778 = vmatpush.msra.mxu0 %v728
    %779 = vmatpush.msra.mxu0 %v726
    %780 = vmatpush.msra.mxu0 %v724
    %781 = vmatpush.msra.mxu0 %v722
    %782 = vmatpush.msra.mxu0 %v720
    %783 = vmatpush.msra.mxu0 %v718
    %784 = vmatpush.msra.mxu0 %v716
    %785 = vmatpush.msra.mxu0 %v714
    %786 = vmatmul.f32.gmra.mxu0 %v439
    %v787 = vpop.f32.mrf.mxu0
    %v788 = vadd.f32 %v202, %v787
    %789 = vmatmul.f32.gmra.mxu0 %v442
    %v790 = vpop.f32.mrf.mxu0
    %v791 = vadd.f32 %v207, %v790
    %792 = vmatmul.f32.gmra.mxu0 %v445
    %v793 = vpop.f32.mrf.mxu0
    %v794 = vadd.f32 %v212, %v793
    %795 = vmatmul.f32.gmra.mxu0 %v448
    %v796 = vpop.f32.mrf.mxu0
    %v797 = vadd.f32 %v217, %v796
    %798 = vmatmul.f32.gmra.mxu0 %v451
    %v799 = vpop.f32.mrf.mxu0
    %v800 = vadd.f32 %v222, %v799
    %801 = vmatmul.f32.gmra.mxu0 %v454
    %v802 = vpop.f32.mrf.mxu0
    %v803 = vadd.f32 %v227, %v802
    %804 = vmatmul.f32.gmra.mxu0 %v457
    %v805 = vpop.f32.mrf.mxu0
    %v806 = vadd.f32 %v232, %v805
    %807 = vmatmul.f32.gmra.mxu0 %v460
    %v808 = vpop.f32.mrf.mxu0
    %v809 = vadd.f32 %v237, %v808
    %810 = vdwg.mxu0
    %v811 = vtanh.pop %v747
    %v812 = vtanh.pop %v788
    %v813 = vtanh.pop %v750
    %v814 = vtanh.pop %v791
    %v815 = vtanh.pop %v753
    %v816 = vtanh.pop %v794
    %v817 = vtanh.pop %v756
    %v818 = vtanh.pop %v797
    %v819 = vtanh.pop %v759
    %v820 = vtanh.pop %v800
    %v821 = vtanh.pop %v762
    %v822 = vtanh.pop %v803
    %v823 = vtanh.pop %v765
    %v824 = vtanh.pop %v806
    %v825 = vtanh.pop %v768
    %v826 = vtanh.pop %v809
    %v828 = vsel %vm437, %v72, 0
    %830 = vmatpush.msra.mxu0 0.0
    %831 = vmatpush.msra.mxu0 0.0
    %832 = vmatpush.msra.mxu0 0.0
    %833 = vmatpush.msra.mxu0 0.0
    %834 = vmatpush.msra.mxu0 0.0
    %835 = vmatpush.msra.mxu0 0.0
    %836 = vmatpush.msra.mxu0 0.0
    %837 = vmatpush.msra.mxu0 0.0
    %838 = vmatpush.msra.mxu0 %v825
    %839 = vmatpush.msra.mxu0 %v823
    %840 = vmatpush.msra.mxu0 %v821
    %841 = vmatpush.msra.mxu0 %v819
    %842 = vmatpush.msra.mxu0 %v817
    %843 = vmatpush.msra.mxu0 %v815
    %844 = vmatpush.msra.mxu0 %v813
    %845 = vmatpush.msra.mxu0 %v811
    %846 = vmatmul.f32.gmra.mxu0 %v828
    %v847 = vpop.f32.mrf.mxu0
    %v848 = vadd.f32 0.0, %v847
    %849 = vdwg.mxu0
    %850 = vmatpush.msra.mxu0 0.0
    %851 = vmatpush.msra.mxu0 0.0
    %852 = vmatpush.msra.mxu0 0.0
    %853 = vmatpush.msra.mxu0 0.0
    %854 = vmatpush.msra.mxu0 0.0
    %855 = vmatpush.msra.mxu0 0.0
    %856 = vmatpush.msra.mxu0 0.0
    %857 = vmatpush.msra.mxu0 0.0
    %858 = vmatpush.msra.mxu0 %v826
    %859 = vmatpush.msra.mxu0 %v824
    %860 = vmatpush.msra.mxu0 %v822
    %861 = vmatpush.msra.mxu0 %v820
    %862 = vmatpush.msra.mxu0 %v818
    %863 = vmatpush.msra.mxu0 %v816
    %864 = vmatpush.msra.mxu0 %v814
    %865 = vmatpush.msra.mxu0 %v812
    %866 = vmatmul.f32.gmra.mxu0 %v828
    %v867 = vpop.f32.mrf.mxu0
    %v868 = vadd.f32 0.0, %v867
    %869 = vdwg.mxu0
    %v870 = vadd.f32 %v605, %v848
    %v871 = vadd.f32 %v606, %v868
    %v872 = vadd.f32 %v870, %v249
    %v873 = vadd.f32 %v871, %v249
    %v875 = vsel %vm84, %v73, 0
    %877 = vmatpush.msra.mxu0 0.0
    %878 = vmatpush.msra.mxu0 0.0
    %879 = vmatpush.msra.mxu0 0.0
    %880 = vmatpush.msra.mxu0 0.0
    %881 = vmatpush.msra.mxu0 0.0
    %882 = vmatpush.msra.mxu0 0.0
    %883 = vmatpush.msra.mxu0 0.0
    %884 = vmatpush.msra.mxu0 0.0
    %885 = vmatpush.msra.mxu0 0.0
    %886 = vmatpush.msra.mxu0 0.0
    %887 = vmatpush.msra.mxu0 0.0
    %888 = vmatpush.msra.mxu0 0.0
    %889 = vmatpush.msra.mxu0 0.0
    %890 = vmatpush.msra.mxu0 0.0
    %891 = vmatpush.msra.mxu0 0.0
    %892 = vmatpush.msra.mxu0 %v872
    %893 = vmatmul.f32.gmra.mxu0 %v875
    %v894 = vpop.f32.mrf.mxu0
    %v895 = vadd.f32 0.0, %v894
    %896 = vdwg.mxu0
    %897 = vmatpush.msra.mxu0 0.0
    %898 = vmatpush.msra.mxu0 0.0
    %899 = vmatpush.msra.mxu0 0.0
    %900 = vmatpush.msra.mxu0 0.0
    %901 = vmatpush.msra.mxu0 0.0
    %902 = vmatpush.msra.mxu0 0.0
    %903 = vmatpush.msra.mxu0 0.0
    %904 = vmatpush.msra.mxu0 0.0
    %905 = vmatpush.msra.mxu0 0.0
    %906 = vmatpush.msra.mxu0 0.0
    %907 = vmatpush.msra.mxu0 0.0
    %908 = vmatpush.msra.mxu0 0.0
    %909 = vmatpush.msra.mxu0 0.0
    %910 = vmatpush.msra.mxu0 0.0
    %911 = vmatpush.msra.mxu0 0.0
    %912 = vmatpush.msra.mxu0 %v873
    %913 = vmatmul.f32.gmra.mxu0 %v875
    %v914 = vpop.f32.mrf.mxu0
    %v915 = vadd.f32 0.0, %v914
    %916 = vdwg.mxu0
    %917 = vset.pattern.permute.xlu0 1
    %918 = vperm.xlu0 %917, %v251
    %v919 = vpop.permute.xlu0 %918
    %921 = vset.pattern.permute.xlu0 1
    %922 = vperm.xlu0 %921, %v252
    %v923 = vpop.permute.xlu0 %922
    %925 = vset.pattern.permute.xlu0 1
    %926 = vperm.xlu0 %925, %v253
    %v927 = vpop.permute.xlu0 %926
    %929 = vset.pattern.permute.xlu0 1
    %930 = vperm.xlu0 %929, %v254
    %v931 = vpop.permute.xlu0 %930
    %933 = vset.pattern.permute.xlu0 1
    %934 = vperm.xlu0 %933, %v255
    %v935 = vpop.permute.xlu0 %934
    %937 = vset.pattern.permute.xlu0 1
    %938 = vperm.xlu0 %937, %v256
    %v939 = vpop.permute.xlu0 %938
    %941 = vset.pattern.permute.xlu0 1
    %942 = vperm.xlu0 %941, %v257
    %v943 = vpop.permute.xlu0 %942
    %945 = vset.pattern.permute.xlu0 1
    %946 = vperm.xlu0 %945, %v258
    %v947 = vpop.permute.xlu0 %946
    %v949 = vadd.f32 %v127, %v919
    %v950 = vadd.f32 %v168, %v919
    %v951 = vadd.f32 %v130, %v923
    %v952 = vadd.f32 %v171, %v923
    %v953 = vadd.f32 %v133, %v927
    %v954 = vadd.f32 %v174, %v927
    %v955 = vadd.f32 %v136, %v931
    %v956 = vadd.f32 %v177, %v931
    %v957 = vadd.f32 %v139, %v935
    %v958 = vadd.f32 %v180, %v935
    %v959 = vadd.f32 %v142, %v939
    %v960 = vadd.f32 %v183, %v939
    %v961 = vadd.f32 %v145, %v943
    %v962 = vadd.f32 %v186, %v943
    %v963 = vadd.f32 %v148, %v947
    %v964 = vadd.f32 %v189, %v947
    %965 = vmatpush.msra.mxu0 0.0
    %966 = vmatpush.msra.mxu0 0.0
    %967 = vmatpush.msra.mxu0 0.0
    %968 = vmatpush.msra.mxu0 0.0
    %969 = vmatpush.msra.mxu0 0.0
    %970 = vmatpush.msra.mxu0 0.0
    %971 = vmatpush.msra.mxu0 0.0
    %972 = vmatpush.msra.mxu0 0.0
    %973 = vmatpush.msra.mxu0 0.0
    %974 = vmatpush.msra.mxu0 0.0
    %975 = vmatpush.msra.mxu0 0.0
    %976 = vmatpush.msra.mxu0 0.0
    %977 = vmatpush.msra.mxu0 0.0
    %978 = vmatpush.msra.mxu0 0.0
    %979 = vmatpush.msra.mxu0 0.0
    %980 = vmatpush.msra.mxu0 %v895
    %981 = vmatmul.f32.gmra.mxu0 %v316
    %v982 = vpop.f32.mrf.mxu0
    %v983 = vadd.f32 %v949, %v982
    %984 = vmatmul.f32.gmra.mxu0 %v319
    %v985 = vpop.f32.mrf.mxu0
    %v986 = vadd.f32 %v951, %v985
    %987 = vmatmul.f32.gmra.mxu0 %v322
    %v988 = vpop.f32.mrf.mxu0
    %v989 = vadd.f32 %v953, %v988
    %990 = vmatmul.f32.gmra.mxu0 %v325
    %v991 = vpop.f32.mrf.mxu0
    %v992 = vadd.f32 %v955, %v991
    %993 = vmatmul.f32.gmra.mxu0 %v328
    %v994 = vpop.f32.mrf.mxu0
    %v995 = vadd.f32 %v957, %v994
    %996 = vmatmul.f32.gmra.mxu0 %v331
    %v997 = vpop.f32.mrf.mxu0
    %v998 = vadd.f32 %v959, %v997
    %999 = vmatmul.f32.gmra.mxu0 %v334
    %v1000 = vpop.f32.mrf.mxu0
    %v1001 = vadd.f32 %v961, %v1000
    %1002 = vmatmul.f32.gmra.mxu0 %v337
    %v1003 = vpop.f32.mrf.mxu0
    %v1004 = vadd.f32 %v963, %v1003
    %1005 = vdwg.mxu0
    %1006 = vmatpush.msra.mxu0 0.0
    %1007 = vmatpush.msra.mxu0 0.0
    %1008 = vmatpush.msra.mxu0 0.0
    %1009 = vmatpush.msra.mxu0 0.0
    %1010 = vmatpush.msra.mxu0 0.0
    %1011 = vmatpush.msra.mxu0 0.0
    %1012 = vmatpush.msra.mxu0 0.0
    %1013 = vmatpush.msra.mxu0 0.0
    %1014 = vmatpush.msra.mxu0 0.0
    %1015 = vmatpush.msra.mxu0 0.0
    %1016 = vmatpush.msra.mxu0 0.0
    %1017 = vmatpush.msra.mxu0 0.0
    %1018 = vmatpush.msra.mxu0 0.0
    %1019 = vmatpush.msra.mxu0 0.0
    %1020 = vmatpush.msra.mxu0 0.0
    %1021 = vmatpush.msra.mxu0 %v915
    %1022 = vmatmul.f32.gmra.mxu0 %v316
    %v1023 = vpop.f32.mrf.mxu0
    %v1024 = vadd.f32 %v950, %v1023
    %1025 = vmatmul.f32.gmra.mxu0 %v319
    %v1026 = vpop.f32.mrf.mxu0
    %v1027 = vadd.f32 %v952, %v1026
    %1028 = vmatmul.f32.gmra.mxu0 %v322
    %v1029 = vpop.f32.mrf.mxu0
    %v1030 = vadd.f32 %v954, %v1029
    %1031 = vmatmul.f32.gmra.mxu0 %v325
    %v1032 = vpop.f32.mrf.mxu0
    %v1033 = vadd.f32 %v956, %v1032
    %1034 = vmatmul.f32.gmra.mxu0 %v328
    %v1035 = vpop.f32.mrf.mxu0
    %v1036 = vadd.f32 %v958, %v1035
    %1037 = vmatmul.f32.gmra.mxu0 %v331
    %v1038 = vpop.f32.mrf.mxu0
    %v1039 = vadd.f32 %v960, %v1038
    %1040 = vmatmul.f32.gmra.mxu0 %v334
    %v1041 = vpop.f32.mrf.mxu0
    %v1042 = vadd.f32 %v962, %v1041
    %1043 = vmatmul.f32.gmra.mxu0 %v337
    %v1044 = vpop.f32.mrf.mxu0
    %v1045 = vadd.f32 %v964, %v1044
    %1046 = vdwg.mxu0
    %v1047 = vtanh.pop %v983
    %v1048 = vtanh.pop %v1024
    %v1049 = vtanh.pop %v986
    %v1050 = vtanh.pop %v1027
    %v1051 = vtanh.pop %v989
    %v1052 = vtanh.pop %v1030
    %v1053 = vtanh.pop %v992
    %v1054 = vtanh.pop %v1033
    %v1055 = vtanh.pop %v995
    %v1056 = vtanh.pop %v1036
    %v1057 = vtanh.pop %v998
    %v1058 = vtanh.pop %v1039
    %v1059 = vtanh.pop %v1001
    %v1060 = vtanh.pop %v1042
    %v1061 = vtanh.pop %v1004
    %v1062 = vtanh.pop %v1045
    %1063 = vmatpush.msra.mxu0 0.0
    %1064 = vmatpush.msra.mxu0 0.0
    %1065 = vmatpush.msra.mxu0 0.0
    %1066 = vmatpush.msra.mxu0 0.0
    %1067 = vmatpush.msra.mxu0 0.0
    %1068 = vmatpush.msra.mxu0 0.0
    %1069 = vmatpush.msra.mxu0 0.0
    %1070 = vmatpush.msra.mxu0 0.0
    %1071 = vmatpush.msra.mxu0 %v1061
    %1072 = vmatpush.msra.mxu0 %v1059
    %1073 = vmatpush.msra.mxu0 %v1057
    %1074 = vmatpush.msra.mxu0 %v1055
    %1075 = vmatpush.msra.mxu0 %v1053
    %1076 = vmatpush.msra.mxu0 %v1051
    %1077 = vmatpush.msra.mxu0 %v1049
    %1078 = vmatpush.msra.mxu0 %v1047
    %1079 = vmatmul.f32.gmra.mxu0 %v439
    %v1080 = vpop.f32.mrf.mxu0
    %v1081 = vadd.f32 %v202, %v1080
    %1082 = vmatmul.f32.gmra.mxu0 %v442
    %v1083 = vpop.f32.mrf.mxu0
    %v1084 = vadd.f32 %v207, %v1083
    %1085 = vmatmul.f32.gmra.mxu0 %v445
    %v1086 = vpop.f32.mrf.mxu0
    %v1087 = vadd.f32 %v212, %v1086
    %1088 = vmatmul.f32.gmra.mxu0 %v448
    %v1089 = vpop.f32.mrf.mxu0
    %v1090 = vadd.f32 %v217, %v1089
    %1091 = vmatmul.f32.gmra.mxu0 %v451
    %v1092 = vpop.f32.mrf.mxu0
    %v1093 = vadd.f32 %v222, %v1092
    %1094 = vmatmul.f32.gmra.mxu0 %v454
    %v1095 = vpop.f32.mrf.mxu0
    %v1096 = vadd.f32 %v227, %v1095
    %1097 = vmatmul.f32.gmra.mxu0 %v457
    %v1098 = vpop.f32.mrf.mxu0
    %v1099 = vadd.f32 %v232, %v1098
    %1100 = vmatmul.f32.gmra.mxu0 %v460
    %v1101 = vpop.f32.mrf.mxu0
    %v1102 = vadd.f32 %v237, %v1101
    %1103 = vdwg.mxu0
    %1104 = vmatpush.msra.mxu0 0.0
    %1105 = vmatpush.msra.mxu0 0.0
    %1106 = vmatpush.msra.mxu0 0.0
    %1107 = vmatpush.msra.mxu0 0.0
    %1108 = vmatpush.msra.mxu0 0.0
    %1109 = vmatpush.msra.mxu0 0.0
    %1110 = vmatpush.msra.mxu0 0.0
    %1111 = vmatpush.msra.mxu0 0.0
    %1112 = vmatpush.msra.mxu0 %v1062
    %1113 = vmatpush.msra.mxu0 %v1060
    %1114 = vmatpush.msra.mxu0 %v1058
    %1115 = vmatpush.msra.mxu0 %v1056
    %1116 = vmatpush.msra.mxu0 %v1054
    %1117 = vmatpush.msra.mxu0 %v1052
    %1118 = vmatpush.msra.mxu0 %v1050
    %1119 = vmatpush.msra.mxu0 %v1048
    %1120 = vmatmul.f32.gmra.mxu0 %v439
    %v1121 = vpop.f32.mrf.mxu0
    %v1122 = vadd.f32 %v202, %v1121
    %1123 = vmatmul.f32.gmra.mxu0 %v442
    %v1124 = vpop.f32.mrf.mxu0
    %v1125 = vadd.f32 %v207, %v1124
    %1126 = vmatmul.f32.gmra.mxu0 %v445
    %v1127 = vpop.f32.mrf.mxu0
    %v1128 = vadd.f32 %v212, %v1127
    %1129 = vmatmul.f32.gmra.mxu0 %v448
    %v1130 = vpop.f32.mrf.mxu0
    %v1131 = vadd.f32 %v217, %v1130
    %1132 = vmatmul.f32.gmra.mxu0 %v451
    %v1133 = vpop.f32.mrf.mxu0
    %v1134 = vadd.f32 %v222, %v1133
    %1135 = vmatmul.f32.gmra.mxu0 %v454
    %v1136 = vpop.f32.mrf.mxu0
    %v1137 = vadd.f32 %v227, %v1136
    %1138 = vmatmul.f32.gmra.mxu0 %v457
    %v1139 = vpop.f32.mrf.mxu0
    %v1140 = vadd.f32 %v232, %v1139
    %1141 = vmatmul.f32.gmra.mxu0 %v460
    %v1142 = vpop.f32.mrf.mxu0
    %v1143 = vadd.f32 %v237, %v1142
    %1144 = vdwg.mxu0
    %v1145 = vtanh.pop %v1081
    %v1146 = vtanh.pop %v1122
    %v1147 = vtanh.pop %v1084
    %v1148 = vtanh.pop %v1125
    %v1149 = vtanh.pop %v1087
    %v1150 = vtanh.pop %v1128
    %v1151 = vtanh.pop %v1090
    %v1152 = vtanh.pop %v1131
    %v1153 = vtanh.pop %v1093
    %v1154 = vtanh.pop %v1134
    %v1155 = vtanh.pop %v1096
    %v1156 = vtanh.pop %v1137
    %v1157 = vtanh.pop %v1099
    %v1158 = vtanh.pop %v1140
    %v1159 = vtanh.pop %v1102
    %v1160 = vtanh.pop %v1143
    %1161 = vmatpush.msra.mxu0 0.0
    %1162 = vmatpush.msra.mxu0 0.0
    %1163 = vmatpush.msra.mxu0 0.0
    %1164 = vmatpush.msra.mxu0 0.0
    %1165 = vmatpush.msra.mxu0 0.0
    %1166 = vmatpush.msra.mxu0 0.0
    %1167 = vmatpush.msra.mxu0 0.0
    %1168 = vmatpush.msra.mxu0 0.0
    %1169 = vmatpush.msra.mxu0 %v1159
    %1170 = vmatpush.msra.mxu0 %v1157
    %1171 = vmatpush.msra.mxu0 %v1155
    %1172 = vmatpush.msra.mxu0 %v1153
    %1173 = vmatpush.msra.mxu0 %v1151
    %1174 = vmatpush.msra.mxu0 %v1149
    %1175 = vmatpush.msra.mxu0 %v1147
    %1176 = vmatpush.msra.mxu0 %v1145
    %1177 = vmatmul.f32.gmra.mxu0 %v561
    %v1178 = vpop.f32.mrf.mxu0
    %v1179 = vadd.f32 0.0, %v1178
    %1180 = vdwg.mxu0
    %1181 = vmatpush.msra.mxu0 0.0
    %1182 = vmatpush.msra.mxu0 0.0
    %1183 = vmatpush.msra.mxu0 0.0
    %1184 = vmatpush.msra.mxu0 0.0
    %1185 = vmatpush.msra.mxu0 0.0
    %1186 = vmatpush.msra.mxu0 0.0
    %1187 = vmatpush.msra.mxu0 0.0
    %1188 = vmatpush.msra.mxu0 0.0
    %1189 = vmatpush.msra.mxu0 %v1160
    %1190 = vmatpush.msra.mxu0 %v1158
    %1191 = vmatpush.msra.mxu0 %v1156
    %1192 = vmatpush.msra.mxu0 %v1154
    %1193 = vmatpush.msra.mxu0 %v1152
    %1194 = vmatpush.msra.mxu0 %v1150
    %1195 = vmatpush.msra.mxu0 %v1148
    %1196 = vmatpush.msra.mxu0 %v1146
    %1197 = vmatmul.f32.gmra.mxu0 %v561
    %v1198 = vpop.f32.mrf.mxu0
    %v1199 = vadd.f32 0.0, %v1198
    %1200 = vdwg.mxu0
    %v1201 = vadd.f32 %v895, %v1179
    %v1202 = vadd.f32 %v915, %v1199
    %v1203 = vadd.f32 %v1201, %v243
    %v1204 = vadd.f32 %v1202, %v243
    %1205 = vmatpush.msra.mxu0 0.0
    %1206 = vmatpush.msra.mxu0 0.0
    %1207 = vmatpush.msra.mxu0 0.0
    %1208 = vmatpush.msra.mxu0 0.0
    %1209 = vmatpush.msra.mxu0 0.0
    %1210 = vmatpush.msra.mxu0 0.0
    %1211 = vmatpush.msra.mxu0 0.0
    %1212 = vmatpush.msra.mxu0 0.0
    %1213 = vmatpush.msra.mxu0 0.0
    %1214 = vmatpush.msra.mxu0 0.0
    %1215 = vmatpush.msra.mxu0 0.0
    %1216 = vmatpush.msra.mxu0 0.0
    %1217 = vmatpush.msra.mxu0 0.0
    %1218 = vmatpush.msra.mxu0 0.0
    %1219 = vmatpush.msra.mxu0 0.0
    %1220 = vmatpush.msra.mxu0 %v1203
    %1221 = vmatmul.f32.gmra.mxu0 %v608
    %v1222 = vpop.f32.mrf.mxu0
    %v1223 = vadd.f32 %v949, %v1222
    %1224 = vmatmul.f32.gmra.mxu0 %v611
    %v1225 = vpop.f32.mrf.mxu0
    %v1226 = vadd.f32 %v951, %v1225
    %1227 = vmatmul.f32.gmra.mxu0 %v614
    %v1228 = vpop.f32.mrf.mxu0
    %v1229 = vadd.f32 %v953, %v1228
    %1230 = vmatmul.f32.gmra.mxu0 %v617
    %v1231 = vpop.f32.mrf.mxu0
    %v1232 = vadd.f32 %v955, %v1231
    %1233 = vmatmul.f32.gmra.mxu0 %v620
    %v1234 = vpop.f32.mrf.mxu0
    %v1235 = vadd.f32 %v957, %v1234
    %1236 = vmatmul.f32.gmra.mxu0 %v623
    %v1237 = vpop.f32.mrf.mxu0
    %v1238 = vadd.f32 %v959, %v1237
    %1239 = vmatmul.f32.gmra.mxu0 %v626
    %v1240 = vpop.f32.mrf.mxu0
    %v1241 = vadd.f32 %v961, %v1240
    %1242 = vmatmul.f32.gmra.mxu0 %v629
    %v1243 = vpop.f32.mrf.mxu0
    %v1244 = vadd.f32 %v963, %v1243
    %1245 = vdwg.mxu0
    %1246 = vmatpush.msra.mxu0 0.0
    %1247 = vmatpush.msra.mxu0 0.0
    %1248 = vmatpush.msra.mxu0 0.0
    %1249 = vmatpush.msra.mxu0 0.0
    %1250 = vmatpush.msra.mxu0 0.0
    %1251 = vmatpush.msra.mxu0 0.0
    %1252 = vmatpush.msra.mxu0 0.0
    %1253 = vmatpush.msra.mxu0 0.0
    %1254 = vmatpush.msra.mxu0 0.0
    %1255 = vmatpush.msra.mxu0 0.0
    %1256 = vmatpush.msra.mxu0 0.0
    %1257 = vmatpush.msra.mxu0 0.0
    %1258 = vmatpush.msra.mxu0 0.0
    %1259 = vmatpush.msra.mxu0 0.0
    %1260 = vmatpush.msra.mxu0 0.0
    %1261 = vmatpush.msra.mxu0 %v1204
    %1262 = vmatmul.f32.gmra.mxu0 %v608
    %v1263 = vpop.f32.mrf.mxu0
    %v1264 = vadd.f32 %v950, %v1263
    %1265 = vmatmul.f32.gmra.mxu0 %v611
    %v1266 = vpop.f32.mrf.mxu0
    %v1267 = vadd.f32 %v952, %v1266
    %1268 = vmatmul.f32.gmra.mxu0 %v614
    %v1269 = vpop.f32.mrf.mxu0
    %v1270 = vadd.f32 %v954, %v1269
    %1271 = vmatmul.f32.gmra.mxu0 %v617
    %v1272 = vpop.f32.mrf.mxu0
    %v1273 = vadd.f32 %v956, %v1272
    %1274 = vmatmul.f32.gmra.mxu0 %v620
    %v1275 = vpop.f32.mrf.mxu0
    %v1276 = vadd.f32 %v958, %v1275
    %1277 = vmatmul.f32.gmra.mxu0 %v623
    %v1278 = vpop.f32.mrf.mxu0
    %v1279 = vadd.f32 %v960, %v1278
    %1280 = vmatmul.f32.gmra.mxu0 %v626
    %v1281 = vpop.f32.mrf.mxu0
    %v1282 = vadd.f32 %v962, %v1281
    %1283 = vmatmul.f32.gmra.mxu0 %v629
    %v1284 = vpop.f32.mrf.mxu0
    %v1285 = vadd.f32 %v964, %v1284
    %1286 = vdwg.mxu0
    %v1287 = vtanh.pop %v1223
    %v1288 = vtanh.pop %v1264
    %v1289 = vtanh.pop %v1226
    %v1290 = vtanh.pop %v1267
    %v1291 = vtanh.pop %v1229
    %v1292 = vtanh.pop %v1270
    %v1293 = vtanh.pop %v1232
    %v1294 = vtanh.pop %v1273
    %v1295 = vtanh.pop %v1235
    %v1296 = vtanh.pop %v1276
    %v1297 = vtanh.pop %v1238
    %v1298 = vtanh.pop %v1279
    %v1299 = vtanh.pop %v1241
    %v1300 = vtanh.pop %v1282
    %v1301 = vtanh.pop %v1244
    %v1302 = vtanh.pop %v1285
    %1303 = vmatpush.msra.mxu0 0.0
    %1304 = vmatpush.msra.mxu0 0.0
    %1305 = vmatpush.msra.mxu0 0.0
    %1306 = vmatpush.msra.mxu0 0.0
    %1307 = vmatpush.msra.mxu0 0.0
    %1308 = vmatpush.msra.mxu0 0.0
    %1309 = vmatpush.msra.mxu0 0.0
    %1310 = vmatpush.msra.mxu0 0.0
    %1311 = vmatpush.msra.mxu0 %v1301
    %1312 = vmatpush.msra.mxu0 %v1299
    %1313 = vmatpush.msra.mxu0 %v1297
    %1314 = vmatpush.msra.mxu0 %v1295
    %1315 = vmatpush.msra.mxu0 %v1293
    %1316 = vmatpush.msra.mxu0 %v1291
    %1317 = vmatpush.msra.mxu0 %v1289
    %1318 = vmatpush.msra.mxu0 %v1287
    %1319 = vmatmul.f32.gmra.mxu0 %v439
    %v1320 = vpop.f32.mrf.mxu0
    %v1321 = vadd.f32 %v202, %v1320
    %1322 = vmatmul.f32.gmra.mxu0 %v442
    %v1323 = vpop.f32.mrf.mxu0
    %v1324 = vadd.f32 %v207, %v1323
    %1325 = vmatmul.f32.gmra.mxu0 %v445
    %v1326 = vpop.f32.mrf.mxu0
    %v1327 = vadd.f32 %v212, %v1326
    %1328 = vmatmul.f32.gmra.mxu0 %v448
    %v1329 = vpop.f32.mrf.mxu0
    %v1330 = vadd.f32 %v217, %v1329
    %1331 = vmatmul.f32.gmra.mxu0 %v451
    %v1332 = vpop.f32.mrf.mxu0
    %v1333 = vadd.f32 %v222, %v1332
    %1334 = vmatmul.f32.gmra.mxu0 %v454
    %v1335 = vpop.f32.mrf.mxu0
    %v1336 = vadd.f32 %v227, %v1335
    %1337 = vmatmul.f32.gmra.mxu0 %v457
    %v1338 = vpop.f32.mrf.mxu0
    %v1339 = vadd.f32 %v232, %v1338
    %1340 = vmatmul.f32.gmra.mxu0 %v460
    %v1341 = vpop.f32.mrf.mxu0
    %v1342 = vadd.f32 %v237, %v1341
    %1343 = vdwg.mxu0
    %1344 = vmatpush.msra.mxu0 0.0
    %1345 = vmatpush.msra.mxu0 0.0
    %1346 = vmatpush.msra.mxu0 0.0
    %1347 = vmatpush.msra.mxu0 0.0
    %1348 = vmatpush.msra.mxu0 0.0
    %1349 = vmatpush.msra.mxu0 0.0
    %1350 = vmatpush.msra.mxu0 0.0
    %1351 = vmatpush.msra.mxu0 0.0
    %1352 = vmatpush.msra.mxu0 %v1302
    %1353 = vmatpush.msra.mxu0 %v1300
    %1354 = vmatpush.msra.mxu0 %v1298
    %1355 = vmatpush.msra.mxu0 %v1296
    %1356 = vmatpush.msra.mxu0 %v1294
    %1357 = vmatpush.msra.mxu0 %v1292
    %1358 = vmatpush.msra.mxu0 %v1290
    %1359 = vmatpush.msra.mxu0 %v1288
    %1360 = vmatmul.f32.gmra.mxu0 %v439
    %v1361 = vpop.f32.mrf.mxu0
    %v1362 = vadd.f32 %v202, %v1361
    %1363 = vmatmul.f32.gmra.mxu0 %v442
    %v1364 = vpop.f32.mrf.mxu0
    %v1365 = vadd.f32 %v207, %v1364
    %1366 = vmatmul.f32.gmra.mxu0 %v445
    %v1367 = vpop.f32.mrf.mxu0
    %v1368 = vadd.f32 %v212, %v1367
    %1369 = vmatmul.f32.gmra.mxu0 %v448
    %v1370 = vpop.f32.mrf.mxu0
    %v1371 = vadd.f32 %v217, %v1370
    %1372 = vmatmul.f32.gmra.mxu0 %v451
    %v1373 = vpop.f32.mrf.mxu0
    %v1374 = vadd.f32 %v222, %v1373
    %1375 = vmatmul.f32.gmra.mxu0 %v454
    %v1376 = vpop.f32.mrf.mxu0
    %v1377 = vadd.f32 %v227, %v1376
    %1378 = vmatmul.f32.gmra.mxu0 %v457
    %v1379 = vpop.f32.mrf.mxu0
    %v1380 = vadd.f32 %v232, %v1379
    %1381 = vmatmul.f32.gmra.mxu0 %v460
    %v1382 = vpop.f32.mrf.mxu0
    %v1383 = vadd.f32 %v237, %v1382
    %1384 = vdwg.mxu0
    %v1385 = vtanh.pop %v1321
    %v1386 = vtanh.pop %v1362
    %v1387 = vtanh.pop %v1324
    %v1388 = vtanh.pop %v1365
    %v1389 = vtanh.pop %v1327
    %v1390 = vtanh.pop %v1368
    %v1391 = vtanh.pop %v1330
    %v1392 = vtanh.pop %v1371
    %v1393 = vtanh.pop %v1333
    %v1394 = vtanh.pop %v1374
    %v1395 = vtanh.pop %v1336
    %v1396 = vtanh.pop %v1377
    %v1397 = vtanh.pop %v1339
    %v1398 = vtanh.pop %v1380
    %v1399 = vtanh.pop %v1342
    %v1400 = vtanh.pop %v1383
    %1401 = vmatpush.msra.mxu0 0.0
    %1402 = vmatpush.msra.mxu0 0.0
    %1403 = vmatpush.msra.mxu0 0.0
    %1404 = vmatpush.msra.mxu0 0.0
    %1405 = vmatpush.msra.mxu0 0.0
    %1406 = vmatpush.msra.mxu0 0.0
    %1407 = vmatpush.msra.mxu0 0.0
    %1408 = vmatpush.msra.mxu0 0.0
    %1409 = vmatpush.msra.mxu0 %v1399
    %1410 = vmatpush.msra.mxu0 %v1397
    %1411 = vmatpush.msra.mxu0 %v1395
    %1412 = vmatpush.msra.mxu0 %v1393
    %1413 = vmatpush.msra.mxu0 %v1391
    %1414 = vmatpush.msra.mxu0 %v1389
    %1415 = vmatpush.msra.mxu0 %v1387
    %1416 = vmatpush.msra.mxu0 %v1385
    %1417 = vmatmul.f32.gmra.mxu0 %v828
    %v1418 = vpop.f32.mrf.mxu0
    %v1419 = vadd.f32 0.0, %v1418
    %1420 = vdwg.mxu0
    %1421 = vmatpush.msra.mxu0 0.0
    %1422 = vmatpush.msra.mxu0 0.0
    %1423 = vmatpush.msra.mxu0 0.0
    %1424 = vmatpush.msra.mxu0 0.0
    %1425 = vmatpush.msra.mxu0 0.0
    %1426 = vmatpush.msra.mxu0 0.0
    %1427 = vmatpush.msra.mxu0 0.0
    %1428 = vmatpush.msra.mxu0 0.0
    %1429 = vmatpush.msra.mxu0 %v1400
    %1430 = vmatpush.msra.mxu0 %v1398
    %1431 = vmatpush.msra.mxu0 %v1396
    %1432 = vmatpush.msra.mxu0 %v1394
    %1433 = vmatpush.msra.mxu0 %v1392
    %1434 = vmatpush.msra.mxu0 %v1390
    %1435 = vmatpush.msra.mxu0 %v1388
    %1436 = vmatpush.msra.mxu0 %v1386
    %1437 = vmatmul.f32.gmra.mxu0 %v828
    %v1438 = vpop.f32.mrf.mxu0
    %v1439 = vadd.f32 0.0, %v1438
    %1440 = vdwg.mxu0
    %v1441 = vadd.f32 %v1203, %v1419
    %v1442 = vadd.f32 %v1204, %v1439
    %v1443 = vadd.f32 %v1441, %v249
    %v1444 = vadd.f32 %v1442, %v249
    %1445 = vmatpush.msra.mxu0 0.0
    %1446 = vmatpush.msra.mxu0 0.0
    %1447 = vmatpush.msra.mxu0 0.0
    %1448 = vmatpush.msra.mxu0 0.0
    %1449 = vmatpush.msra.mxu0 0.0
    %1450 = vmatpush.msra.mxu0 0.0
    %1451 = vmatpush.msra.mxu0 0.0
    %1452 = vmatpush.msra.mxu0 0.0
    %1453 = vmatpush.msra.mxu0 0.0
    %1454 = vmatpush.msra.mxu0 0.0
    %1455 = vmatpush.msra.mxu0 0.0
    %1456 = vmatpush.msra.mxu0 0.0
    %1457 = vmatpush.msra.mxu0 0.0
    %1458 = vmatpush.msra.mxu0 0.0
    %1459 = vmatpush.msra.mxu0 0.0
    %1460 = vmatpush.msra.mxu0 %v1443
    %1461 = vmatmul.f32.gmra.mxu0 %v875
    %v1462 = vpop.f32.mrf.mxu0
    %v1463 = vadd.f32 0.0, %v1462
    %1464 = vdwg.mxu0
    %1465 = vmatpush.msra.mxu0 0.0
    %1466 = vmatpush.msra.mxu0 0.0
    %1467 = vmatpush.msra.mxu0 0.0
    %1468 = vmatpush.msra.mxu0 0.0
    %1469 = vmatpush.msra.mxu0 0.0
    %1470 = vmatpush.msra.mxu0 0.0
    %1471 = vmatpush.msra.mxu0 0.0
    %1472 = vmatpush.msra.mxu0 0.0
    %1473 = vmatpush.msra.mxu0 0.0
    %1474 = vmatpush.msra.mxu0 0.0
    %1475 = vmatpush.msra.mxu0 0.0
    %1476 = vmatpush.msra.mxu0 0.0
    %1477 = vmatpush.msra.mxu0 0.0
    %1478 = vmatpush.msra.mxu0 0.0
    %1479 = vmatpush.msra.mxu0 0.0
    %1480 = vmatpush.msra.mxu0 %v1444
    %1481 = vmatmul.f32.gmra.mxu0 %v875
    %v1482 = vpop.f32.mrf.mxu0
    %v1483 = vadd.f32 0.0, %v1482
    %1484 = vdwg.mxu0
    %1485 = vset.pattern.permute.xlu0 2
    %1486 = vperm.xlu0 %1485, %v251
    %v1487 = vpop.permute.xlu0 %1486
    %1489 = vset.pattern.permute.xlu0 2
    %1490 = vperm.xlu0 %1489, %v252
    %v1491 = vpop.permute.xlu0 %1490
    %1493 = vset.pattern.permute.xlu0 2
    %1494 = vperm.xlu0 %1493, %v253
    %v1495 = vpop.permute.xlu0 %1494
    %1497 = vset.pattern.permute.xlu0 2
    %1498 = vperm.xlu0 %1497, %v254
    %v1499 = vpop.permute.xlu0 %1498
    %1501 = vset.pattern.permute.xlu0 2
    %1502 = vperm.xlu0 %1501, %v255
    %v1503 = vpop.permute.xlu0 %1502
    %1505 = vset.pattern.permute.xlu0 2
    %1506 = vperm.xlu0 %1505, %v256
    %v1507 = vpop.permute.xlu0 %1506
    %1509 = vset.pattern.permute.xlu0 2
    %1510 = vperm.xlu0 %1509, %v257
    %v1511 = vpop.permute.xlu0 %1510
    %1513 = vset.pattern.permute.xlu0 2
    %1514 = vperm.xlu0 %1513, %v258
    %v1515 = vpop.permute.xlu0 %1514
    %v1517 = vadd.f32 %v127, %v1487
    %v1518 = vadd.f32 %v168, %v1487
    %v1519 = vadd.f32 %v130, %v1491
    %v1520 = vadd.f32 %v171, %v1491
    %v1521 = vadd.f32 %v133, %v1495
    %v1522 = vadd.f32 %v174, %v1495
    %v1523 = vadd.f32 %v136, %v1499
    %v1524 = vadd.f32 %v177, %v1499
    %v1525 = vadd.f32 %v139, %v1503
    %v1526 = vadd.f32 %v180, %v1503
    %v1527 = vadd.f32 %v142, %v1507
    %v1528 = vadd.f32 %v183, %v1507
    %v1529 = vadd.f32 %v145, %v1511
    %v1530 = vadd.f32 %v186, %v1511
    %v1531 = vadd.f32 %v148, %v1515
    %v1532 = vadd.f32 %v189, %v1515
    %1533 = vmatpush.msra.mxu0 0.0
    %1534 = vmatpush.msra.mxu0 0.0
    %1535 = vmatpush.msra.mxu0 0.0
    %1536 = vmatpush.msra.mxu0 0.0
    %1537 = vmatpush.msra.mxu0 0.0
    %1538 = vmatpush.msra.mxu0 0.0
    %1539 = vmatpush.msra.mxu0 0.0
    %1540 = vmatpush.msra.mxu0 0.0
    %1541 = vmatpush.msra.mxu0 0.0
    %1542 = vmatpush.msra.mxu0 0.0
    %1543 = vmatpush.msra.mxu0 0.0
    %1544 = vmatpush.msra.mxu0 0.0
    %1545 = vmatpush.msra.mxu0 0.0
    %1546 = vmatpush.msra.mxu0 0.0
    %1547 = vmatpush.msra.mxu0 0.0
    %1548 = vmatpush.msra.mxu0 %v1463
    %1549 = vmatmul.f32.gmra.mxu0 %v316
    %v1550 = vpop.f32.mrf.mxu0
    %v1551 = vadd.f32 %v1517, %v1550
    %1552 = vmatmul.f32.gmra.mxu0 %v319
    %v1553 = vpop.f32.mrf.mxu0
    %v1554 = vadd.f32 %v1519, %v1553
    %1555 = vmatmul.f32.gmra.mxu0 %v322
    %v1556 = vpop.f32.mrf.mxu0
    %v1557 = vadd.f32 %v1521, %v1556
    %1558 = vmatmul.f32.gmra.mxu0 %v325
    %v1559 = vpop.f32.mrf.mxu0
    %v1560 = vadd.f32 %v1523, %v1559
    %1561 = vmatmul.f32.gmra.mxu0 %v328
    %v1562 = vpop.f32.mrf.mxu0
    %v1563 = vadd.f32 %v1525, %v1562
    %1564 = vmatmul.f32.gmra.mxu0 %v331
    %v1565 = vpop.f32.mrf.mxu0
    %v1566 = vadd.f32 %v1527, %v1565
    %1567 = vmatmul.f32.gmra.mxu0 %v334
    %v1568 = vpop.f32.mrf.mxu0
    %v1569 = vadd.f32 %v1529, %v1568
    %1570 = vmatmul.f32.gmra.mxu0 %v337
    %v1571 = vpop.f32.mrf.mxu0
    %v1572 = vadd.f32 %v1531, %v1571
    %1573 = vdwg.mxu0
    %1574 = vmatpush.msra.mxu0 0.0
    %1575 = vmatpush.msra.mxu0 0.0
    %1576 = vmatpush.msra.mxu0 0.0
    %1577 = vmatpush.msra.mxu0 0.0
    %1578 = vmatpush.msra.mxu0 0.0
    %1579 = vmatpush.msra.mxu0 0.0
    %1580 = vmatpush.msra.mxu0 0.0
    %1581 = vmatpush.msra.mxu0 0.0
    %1582 = vmatpush.msra.mxu0 0.0
    %1583 = vmatpush.msra.mxu0 0.0
    %1584 = vmatpush.msra.mxu0 0.0
    %1585 = vmatpush.msra.mxu0 0.0
    %1586 = vmatpush.msra.mxu0 0.0
    %1587 = vmatpush.msra.mxu0 0.0
    %1588 = vmatpush.msra.mxu0 0.0
    %1589 = vmatpush.msra.mxu0 %v1483
    %1590 = vmatmul.f32.gmra.mxu0 %v316
    %v1591 = vpop.f32.mrf.mxu0
    %v1592 = vadd.f32 %v1518, %v1591
    %1593 = vmatmul.f32.gmra.mxu0 %v319
    %v1594 = vpop.f32.mrf.mxu0
    %v1595 = vadd.f32 %v1520, %v1594
    %1596 = vmatmul.f32.gmra.mxu0 %v322
    %v1597 = vpop.f32.mrf.mxu0
    %v1598 = vadd.f32 %v1522, %v1597
    %1599 = vmatmul.f32.gmra.mxu0 %v325
    %v1600 = vpop.f32.mrf.mxu0
    %v1601 = vadd.f32 %v1524, %v1600
    %1602 = vmatmul.f32.gmra.mxu0 %v328
    %v1603 = vpop.f32.mrf.mxu0
    %v1604 = vadd.f32 %v1526, %v1603
    %1605 = vmatmul.f32.gmra.mxu0 %v331
    %v1606 = vpop.f32.mrf.mxu0
    %v1607 = vadd.f32 %v1528, %v1606
    %1608 = vmatmul.f32.gmra.mxu0 %v334
    %v1609 = vpop.f32.mrf.mxu0
    %v1610 = vadd.f32 %v1530, %v1609
    %1611 = vmatmul.f32.gmra.mxu0 %v337
    %v1612 = vpop.f32.mrf.mxu0
    %v1613 = vadd.f32 %v1532, %v1612
    %1614 = vdwg.mxu0
    %v1615 = vtanh.pop %v1551
    %v1616 = vtanh.pop %v1592
    %v1617 = vtanh.pop %v1554
    %v1618 = vtanh.pop %v1595
    %v1619 = vtanh.pop %v1557
    %v1620 = vtanh.pop %v1598
    %v1621 = vtanh.pop %v1560
    %v1622 = vtanh.pop %v1601
    %v1623 = vtanh.pop %v1563
    %v1624 = vtanh.pop %v1604
    %v1625 = vtanh.pop %v1566
    %v1626 = vtanh.pop %v1607
    %v1627 = vtanh.pop %v1569
    %v1628 = vtanh.pop %v1610
    %v1629 = vtanh.pop %v1572
    %v1630 = vtanh.pop %v1613
    %1631 = vmatpush.msra.mxu0 0.0
    %1632 = vmatpush.msra.mxu0 0.0
    %1633 = vmatpush.msra.mxu0 0.0
    %1634 = vmatpush.msra.mxu0 0.0
    %1635 = vmatpush.msra.mxu0 0.0
    %1636 = vmatpush.msra.mxu0 0.0
    %1637 = vmatpush.msra.mxu0 0.0
    %1638 = vmatpush.msra.mxu0 0.0
    %1639 = vmatpush.msra.mxu0 %v1629
    %1640 = vmatpush.msra.mxu0 %v1627
    %1641 = vmatpush.msra.mxu0 %v1625
    %1642 = vmatpush.msra.mxu0 %v1623
    %1643 = vmatpush.msra.mxu0 %v1621
    %1644 = vmatpush.msra.mxu0 %v1619
    %1645 = vmatpush.msra.mxu0 %v1617
    %1646 = vmatpush.msra.mxu0 %v1615
    %1647 = vmatmul.f32.gmra.mxu0 %v439
    %v1648 = vpop.f32.mrf.mxu0
    %v1649 = vadd.f32 %v202, %v1648
    %1650 = vmatmul.f32.gmra.mxu0 %v442
    %v1651 = vpop.f32.mrf.mxu0
    %v1652 = vadd.f32 %v207, %v1651
    %1653 = vmatmul.f32.gmra.mxu0 %v445
    %v1654 = vpop.f32.mrf.mxu0
    %v1655 = vadd.f32 %v212, %v1654
    %1656 = vmatmul.f32.gmra.mxu0 %v448
    %v1657 = vpop.f32.mrf.mxu0
    %v1658 = vadd.f32 %v217, %v1657
    %1659 = vmatmul.f32.gmra.mxu0 %v451
    %v1660 = vpop.f32.mrf.mxu0
    %v1661 = vadd.f32 %v222, %v1660
    %1662 = vmatmul.f32.gmra.mxu0 %v454
    %v1663 = vpop.f32.mrf.mxu0
    %v1664 = vadd.f32 %v227, %v1663
    %1665 = vmatmul.f32.gmra.mxu0 %v457
    %v1666 = vpop.f32.mrf.mxu0
    %v1667 = vadd.f32 %v232, %v1666
    %1668 = vmatmul.f32.gmra.mxu0 %v460
    %v1669 = vpop.f32.mrf.mxu0
    %v1670 = vadd.f32 %v237, %v1669
    %1671 = vdwg.mxu0
    %1672 = vmatpush.msra.mxu0 0.0
    %1673 = vmatpush.msra.mxu0 0.0
    %1674 = vmatpush.msra.mxu0 0.0
    %1675 = vmatpush.msra.mxu0 0.0
    %1676 = vmatpush.msra.mxu0 0.0
    %1677 = vmatpush.msra.mxu0 0.0
    %1678 = vmatpush.msra.mxu0 0.0
    %1679 = vmatpush.msra.mxu0 0.0
    %1680 = vmatpush.msra.mxu0 %v1630
    %1681 = vmatpush.msra.mxu0 %v1628
    %1682 = vmatpush.msra.mxu0 %v1626
    %1683 = vmatpush.msra.mxu0 %v1624
    %1684 = vmatpush.msra.mxu0 %v1622
    %1685 = vmatpush.msra.mxu0 %v1620
    %1686 = vmatpush.msra.mxu0 %v1618
    %1687 = vmatpush.msra.mxu0 %v1616
    %1688 = vmatmul.f32.gmra.mxu0 %v439
    %v1689 = vpop.f32.mrf.mxu0
    %v1690 = vadd.f32 %v202, %v1689
    %1691 = vmatmul.f32.gmra.mxu0 %v442
    %v1692 = vpop.f32.mrf.mxu0
    %v1693 = vadd.f32 %v207, %v1692
    %1694 = vmatmul.f32.gmra.mxu0 %v445
    %v1695 = vpop.f32.mrf.mxu0
    %v1696 = vadd.f32 %v212, %v1695
    %1697 = vmatmul.f32.gmra.mxu0 %v448
    %v1698 = vpop.f32.mrf.mxu0
    %v1699 = vadd.f32 %v217, %v1698
    %1700 = vmatmul.f32.gmra.mxu0 %v451
    %v1701 = vpop.f32.mrf.mxu0
    %v1702 = vadd.f32 %v222, %v1701
    %1703 = vmatmul.f32.gmra.mxu0 %v454
    %v1704 = vpop.f32.mrf.mxu0
    %v1705 = vadd.f32 %v227, %v1704
    %1706 = vmatmul.f32.gmra.mxu0 %v457
    %v1707 = vpop.f32.mrf.mxu0
    %v1708 = vadd.f32 %v232, %v1707
    %1709 = vmatmul.f32.gmra.mxu0 %v460
    %v1710 = vpop.f32.mrf.mxu0
    %v1711 = vadd.f32 %v237, %v1710
    %1712 = vdwg.mxu0
    %v1713 = vtanh.pop %v1649
    %v1714 = vtanh.pop %v1690
    %v1715 = vtanh.pop %v1652
    %v1716 = vtanh.pop %v1693
    %v1717 = vtanh.pop %v1655
    %v1718 = vtanh.pop %v1696
    %v1719 = vtanh.pop %v1658
    %v1720 = vtanh.pop %v1699
    %v1721 = vtanh.pop %v1661
    %v1722 = vtanh.pop %v1702
    %v1723 = vtanh.pop %v1664
    %v1724 = vtanh.pop %v1705
    %v1725 = vtanh.pop %v1667
    %v1726 = vtanh.pop %v1708
    %v1727 = vtanh.pop %v1670
    %v1728 = vtanh.pop %v1711
    %1729 = vmatpush.msra.mxu0 0.0
    %1730 = vmatpush.msra.mxu0 0.0
    %1731 = vmatpush.msra.mxu0 0.0
    %1732 = vmatpush.msra.mxu0 0.0
    %1733 = vmatpush.msra.mxu0 0.0
    %1734 = vmatpush.msra.mxu0 0.0
    %1735 = vmatpush.msra.mxu0 0.0
    %1736 = vmatpush.msra.mxu0 0.0
    %1737 = vmatpush.msra.mxu0 %v1727
    %1738 = vmatpush.msra.mxu0 %v1725
    %1739 = vmatpush.msra.mxu0 %v1723
    %1740 = vmatpush.msra.mxu0 %v1721
    %1741 = vmatpush.msra.mxu0 %v1719
    %1742 = vmatpush.msra.mxu0 %v1717
    %1743 = vmatpush.msra.mxu0 %v1715
    %1744 = vmatpush.msra.mxu0 %v1713
    %1745 = vmatmul.f32.gmra.mxu0 %v561
    %v1746 = vpop.f32.mrf.mxu0
    %v1747 = vadd.f32 0.0, %v1746
    %1748 = vdwg.mxu0
    %1749 = vmatpush.msra.mxu0 0.0
    %1750 = vmatpush.msra.mxu0 0.0
    %1751 = vmatpush.msra.mxu0 0.0
    %1752 = vmatpush.msra.mxu0 0.0
    %1753 = vmatpush.msra.mxu0 0.0
    %1754 = vmatpush.msra.mxu0 0.0
    %1755 = vmatpush.msra.mxu0 0.0
    %1756 = vmatpush.msra.mxu0 0.0
    %1757 = vmatpush.msra.mxu0 %v1728
    %1758 = vmatpush.msra.mxu0 %v1726
    %1759 = vmatpush.msra.mxu0 %v1724
    %1760 = vmatpush.msra.mxu0 %v1722
    %1761 = vmatpush.msra.mxu0 %v1720
    %1762 = vmatpush.msra.mxu0 %v1718
    %1763 = vmatpush.msra.mxu0 %v1716
    %1764 = vmatpush.msra.mxu0 %v1714
    %1765 = vmatmul.f32.gmra.mxu0 %v561
    %v1766 = vpop.f32.mrf.mxu0
    %v1767 = vadd.f32 0.0, %v1766
    %1768 = vdwg.mxu0
    %v1769 = vadd.f32 %v1463, %v1747
    %v1770 = vadd.f32 %v1483, %v1767
    %v1771 = vadd.f32 %v1769, %v243
    %v1772 = vadd.f32 %v1770, %v243
    %1773 = vmatpush.msra.mxu0 0.0
    %1774 = vmatpush.msra.mxu0 0.0
    %1775 = vmatpush.msra.mxu0 0.0
    %1776 = vmatpush.msra.mxu0 0.0
    %1777 = vmatpush.msra.mxu0 0.0
    %1778 = vmatpush.msra.mxu0 0.0
    %1779 = vmatpush.msra.mxu0 0.0
    %1780 = vmatpush.msra.mxu0 0.0
    %1781 = vmatpush.msra.mxu0 0.0
    %1782 = vmatpush.msra.mxu0 0.0
    %1783 = vmatpush.msra.mxu0 0.0
    %1784 = vmatpush.msra.mxu0 0.0
    %1785 = vmatpush.msra.mxu0 0.0
    %1786 = vmatpush.msra.mxu0 0.0
    %1787 = vmatpush.msra.mxu0 0.0
    %1788 = vmatpush.msra.mxu0 %v1771
    %1789 = vmatmul.f32.gmra.mxu0 %v608
    %v1790 = vpop.f32.mrf.mxu0
    %v1791 = vadd.f32 %v1517, %v1790
    %1792 = vmatmul.f32.gmra.mxu0 %v611
    %v1793 = vpop.f32.mrf.mxu0
    %v1794 = vadd.f32 %v1519, %v1793
    %1795 = vmatmul.f32.gmra.mxu0 %v614
    %v1796 = vpop.f32.mrf.mxu0
    %v1797 = vadd.f32 %v1521, %v1796
    %1798 = vmatmul.f32.gmra.mxu0 %v617
    %v1799 = vpop.f32.mrf.mxu0
    %v1800 = vadd.f32 %v1523, %v1799
    %1801 = vmatmul.f32.gmra.mxu0 %v620
    %v1802 = vpop.f32.mrf.mxu0
    %v1803 = vadd.f32 %v1525, %v1802
    %1804 = vmatmul.f32.gmra.mxu0 %v623
    %v1805 = vpop.f32.mrf.mxu0
    %v1806 = vadd.f32 %v1527, %v1805
    %1807 = vmatmul.f32.gmra.mxu0 %v626
    %v1808 = vpop.f32.mrf.mxu0
    %v1809 = vadd.f32 %v1529, %v1808
    %1810 = vmatmul.f32.gmra.mxu0 %v629
    %v1811 = vpop.f32.mrf.mxu0
    %v1812 = vadd.f32 %v1531, %v1811
    %1813 = vdwg.mxu0
    %1814 = vmatpush.msra.mxu0 0.0
    %1815 = vmatpush.msra.mxu0 0.0
    %1816 = vmatpush.msra.mxu0 0.0
    %1817 = vmatpush.msra.mxu0 0.0
    %1818 = vmatpush.msra.mxu0 0.0
    %1819 = vmatpush.msra.mxu0 0.0
    %1820 = vmatpush.msra.mxu0 0.0
    %1821 = vmatpush.msra.mxu0 0.0
    %1822 = vmatpush.msra.mxu0 0.0
    %1823 = vmatpush.msra.mxu0 0.0
    %1824 = vmatpush.msra.mxu0 0.0
    %1825 = vmatpush.msra.mxu0 0.0
    %1826 = vmatpush.msra.mxu0 0.0
    %1827 = vmatpush.msra.mxu0 0.0
    %1828 = vmatpush.msra.mxu0 0.0
    %1829 = vmatpush.msra.mxu0 %v1772
    %1830 = vmatmul.f32.gmra.mxu0 %v608
    %v1831 = vpop.f32.mrf.mxu0
    %v1832 = vadd.f32 %v1518, %v1831
    %1833 = vmatmul.f32.gmra.mxu0 %v611
    %v1834 = vpop.f32.mrf.mxu0
    %v1835 = vadd.f32 %v1520, %v1834
    %1836 = vmatmul.f32.gmra.mxu0 %v614
    %v1837 = vpop.f32.mrf.mxu0
    %v1838 = vadd.f32 %v1522, %v1837
    %1839 = vmatmul.f32.gmra.mxu0 %v617
    %v1840 = vpop.f32.mrf.mxu0
    %v1841 = vadd.f32 %v1524, %v1840
    %1842 = vmatmul.f32.gmra.mxu0 %v620
    %v1843 = vpop.f32.mrf.mxu0
    %v1844 = vadd.f32 %v1526, %v1843
    %1845 = vmatmul.f32.gmra.mxu0 %v623
    %v1846 = vpop.f32.mrf.mxu0
    %v1847 = vadd.f32 %v1528, %v1846
    %1848 = vmatmul.f32.gmra.mxu0 %v626
    %v1849 = vpop.f32.mrf.mxu0
    %v1850 = vadd.f32 %v1530, %v1849
    %1851 = vmatmul.f32.gmra.mxu0 %v629
    %v1852 = vpop.f32.mrf.mxu0
    %v1853 = vadd.f32 %v1532, %v1852
    %1854 = vdwg.mxu0
    %v1855 = vtanh.pop %v1791
    %v1856 = vtanh.pop %v1832
    %v1857 = vtanh.pop %v1794
    %v1858 = vtanh.pop %v1835
    %v1859 = vtanh.pop %v1797
    %v1860 = vtanh.pop %v1838
    %v1861 = vtanh.pop %v1800
    %v1862 = vtanh.pop %v1841
    %v1863 = vtanh.pop %v1803
    %v1864 = vtanh.pop %v1844
    %v1865 = vtanh.pop %v1806
    %v1866 = vtanh.pop %v1847
    %v1867 = vtanh.pop %v1809
    %v1868 = vtanh.pop %v1850
    %v1869 = vtanh.pop %v1812
    %v1870 = vtanh.pop %v1853
    %1871 = vmatpush.msra.mxu0 0.0
    %1872 = vmatpush.msra.mxu0 0.0
    %1873 = vmatpush.msra.mxu0 0.0
    %1874 = vmatpush.msra.mxu0 0.0
    %1875 = vmatpush.msra.mxu0 0.0
    %1876 = vmatpush.msra.mxu0 0.0
    %1877 = vmatpush.msra.mxu0 0.0
    %1878 = vmatpush.msra.mxu0 0.0
    %1879 = vmatpush.msra.mxu0 %v1869
    %1880 = vmatpush.msra.mxu0 %v1867
    %1881 = vmatpush.msra.mxu0 %v1865
    %1882 = vmatpush.msra.mxu0 %v1863
    %1883 = vmatpush.msra.mxu0 %v1861
    %1884 = vmatpush.msra.mxu0 %v1859
    %1885 = vmatpush.msra.mxu0 %v1857
    %1886 = vmatpush.msra.mxu0 %v1855
    %1887 = vmatmul.f32.gmra.mxu0 %v439
    %v1888 = vpop.f32.mrf.mxu0
    %v1889 = vadd.f32 %v202, %v1888
    %1890 = vmatmul.f32.gmra.mxu0 %v442
    %v1891 = vpop.f32.mrf.mxu0
    %v1892 = vadd.f32 %v207, %v1891
    %1893 = vmatmul.f32.gmra.mxu0 %v445
    %v1894 = vpop.f32.mrf.mxu0
    %v1895 = vadd.f32 %v212, %v1894
    %1896 = vmatmul.f32.gmra.mxu0 %v448
    %v1897 = vpop.f32.mrf.mxu0
    %v1898 = vadd.f32 %v217, %v1897
    %1899 = vmatmul.f32.gmra.mxu0 %v451
    %v1900 = vpop.f32.mrf.mxu0
    %v1901 = vadd.f32 %v222, %v1900
    %1902 = vmatmul.f32.gmra.mxu0 %v454
    %v1903 = vpop.f32.mrf.mxu0
    %v1904 = vadd.f32 %v227, %v1903
    %1905 = vmatmul.f32.gmra.mxu0 %v457
    %v1906 = vpop.f32.mrf.mxu0
    %v1907 = vadd.f32 %v232, %v1906
    %1908 = vmatmul.f32.gmra.mxu0 %v460
    %v1909 = vpop.f32.mrf.mxu0
    %v1910 = vadd.f32 %v237, %v1909
    %1911 = vdwg.mxu0
    %1912 = vmatpush.msra.mxu0 0.0
    %1913 = vmatpush.msra.mxu0 0.0
    %1914 = vmatpush.msra.mxu0 0.0
    %1915 = vmatpush.msra.mxu0 0.0
    %1916 = vmatpush.msra.mxu0 0.0
    %1917 = vmatpush.msra.mxu0 0.0
    %1918 = vmatpush.msra.mxu0 0.0
    %1919 = vmatpush.msra.mxu0 0.0
    %1920 = vmatpush.msra.mxu0 %v1870
    %1921 = vmatpush.msra.mxu0 %v1868
    %1922 = vmatpush.msra.mxu0 %v1866
    %1923 = vmatpush.msra.mxu0 %v1864
    %1924 = vmatpush.msra.mxu0 %v1862
    %1925 = vmatpush.msra.mxu0 %v1860
    %1926 = vmatpush.msra.mxu0 %v1858
    %1927 = vmatpush.msra.mxu0 %v1856
    %1928 = vmatmul.f32.gmra.mxu0 %v439
    %v1929 = vpop.f32.mrf.mxu0
    %v1930 = vadd.f32 %v202, %v1929
    %1931 = vmatmul.f32.gmra.mxu0 %v442
    %v1932 = vpop.f32.mrf.mxu0
    %v1933 = vadd.f32 %v207, %v1932
    %1934 = vmatmul.f32.gmra.mxu0 %v445
    %v1935 = vpop.f32.mrf.mxu0
    %v1936 = vadd.f32 %v212, %v1935
    %1937 = vmatmul.f32.gmra.mxu0 %v448
    %v1938 = vpop.f32.mrf.mxu0
    %v1939 = vadd.f32 %v217, %v1938
    %1940 = vmatmul.f32.gmra.mxu0 %v451
    %v1941 = vpop.f32.mrf.mxu0
    %v1942 = vadd.f32 %v222, %v1941
    %1943 = vmatmul.f32.gmra.mxu0 %v454
    %v1944 = vpop.f32.mrf.mxu0
    %v1945 = vadd.f32 %v227, %v1944
    %1946 = vmatmul.f32.gmra.mxu0 %v457
    %v1947 = vpop.f32.mrf.mxu0
    %v1948 = vadd.f32 %v232, %v1947
    %1949 = vmatmul.f32.gmra.mxu0 %v460
    %v1950 = vpop.f32.mrf.mxu0
    %v1951 = vadd.f32 %v237, %v1950
    %1952 = vdwg.mxu0
    %v1953 = vtanh.pop %v1889
    %v1954 = vtanh.pop %v1930
    %v1955 = vtanh.pop %v1892
    %v1956 = vtanh.pop %v1933
    %v1957 = vtanh.pop %v1895
    %v1958 = vtanh.pop %v1936
    %v1959 = vtanh.pop %v1898
    %v1960 = vtanh.pop %v1939
    %v1961 = vtanh.pop %v1901
    %v1962 = vtanh.pop %v1942
    %v1963 = vtanh.pop %v1904
    %v1964 = vtanh.pop %v1945
    %v1965 = vtanh.pop %v1907
    %v1966 = vtanh.pop %v1948
    %v1967 = vtanh.pop %v1910
    %v1968 = vtanh.pop %v1951
    %1969 = vmatpush.msra.mxu0 0.0
    %1970 = vmatpush.msra.mxu0 0.0
    %1971 = vmatpush.msra.mxu0 0.0
    %1972 = vmatpush.msra.mxu0 0.0
    %1973 = vmatpush.msra.mxu0 0.0
    %1974 = vmatpush.msra.mxu0 0.0
    %1975 = vmatpush.msra.mxu0 0.0
    %1976 = vmatpush.msra.mxu0 0.0
    %1977 = vmatpush.msra.mxu0 %v1967
    %1978 = vmatpush.msra.mxu0 %v1965
    %1979 = vmatpush.msra.mxu0 %v1963
    %1980 = vmatpush.msra.mxu0 %v1961
    %1981 = vmatpush.msra.mxu0 %v1959
    %1982 = vmatpush.msra.mxu0 %v1957
    %1983 = vmatpush.msra.mxu0 %v1955
    %1984 = vmatpush.msra.mxu0 %v1953
    %1985 = vmatmul.f32.gmra.mxu0 %v828
    %v1986 = vpop.f32.mrf.mxu0
    %v1987 = vadd.f32 0.0, %v1986
    %1988 = vdwg.mxu0
    %1989 = vmatpush.msra.mxu0 0.0
    %1990 = vmatpush.msra.mxu0 0.0
    %1991 = vmatpush.msra.mxu0 0.0
    %1992 = vmatpush.msra.mxu0 0.0
    %1993 = vmatpush.msra.mxu0 0.0
    %1994 = vmatpush.msra.mxu0 0.0
    %1995 = vmatpush.msra.mxu0 0.0
    %1996 = vmatpush.msra.mxu0 0.0
    %1997 = vmatpush.msra.mxu0 %v1968
    %1998 = vmatpush.msra.mxu0 %v1966
    %1999 = vmatpush.msra.mxu0 %v1964
    %2000 = vmatpush.msra.mxu0 %v1962
    %2001 = vmatpush.msra.mxu0 %v1960
    %2002 = vmatpush.msra.mxu0 %v1958
    %2003 = vmatpush.msra.mxu0 %v1956
    %2004 = vmatpush.msra.mxu0 %v1954
    %2005 = vmatmul.f32.gmra.mxu0 %v828
    %v2006 = vpop.f32.mrf.mxu0
    %v2007 = vadd.f32 0.0, %v2006
    %2008 = vdwg.mxu0
    %v2009 = vadd.f32 %v1771, %v1987
    %v2010 = vadd.f32 %v1772, %v2007
    %v2011 = vadd.f32 %v2009, %v249
    %v2012 = vadd.f32 %v2010, %v249
    %2013 = vmatpush.msra.mxu0 0.0
    %2014 = vmatpush.msra.mxu0 0.0
    %2015 = vmatpush.msra.mxu0 0.0
    %2016 = vmatpush.msra.mxu0 0.0
    %2017 = vmatpush.msra.mxu0 0.0
    %2018 = vmatpush.msra.mxu0 0.0
    %2019 = vmatpush.msra.mxu0 0.0
    %2020 = vmatpush.msra.mxu0 0.0
    %2021 = vmatpush.msra.mxu0 0.0
    %2022 = vmatpush.msra.mxu0 0.0
    %2023 = vmatpush.msra.mxu0 0.0
    %2024 = vmatpush.msra.mxu0 0.0
    %2025 = vmatpush.msra.mxu0 0.0
    %2026 = vmatpush.msra.mxu0 0.0
    %2027 = vmatpush.msra.mxu0 0.0
    %2028 = vmatpush.msra.mxu0 %v2011
    %2029 = vmatmul.f32.gmra.mxu0 %v875
    %v2030 = vpop.f32.mrf.mxu0
    %v2031 = vadd.f32 0.0, %v2030
    %2032 = vdwg.mxu0
    %2033 = vmatpush.msra.mxu0 0.0
    %2034 = vmatpush.msra.mxu0 0.0
    %2035 = vmatpush.msra.mxu0 0.0
    %2036 = vmatpush.msra.mxu0 0.0
    %2037 = vmatpush.msra.mxu0 0.0
    %2038 = vmatpush.msra.mxu0 0.0
    %2039 = vmatpush.msra.mxu0 0.0
    %2040 = vmatpush.msra.mxu0 0.0
    %2041 = vmatpush.msra.mxu0 0.0
    %2042 = vmatpush.msra.mxu0 0.0
    %2043 = vmatpush.msra.mxu0 0.0
    %2044 = vmatpush.msra.mxu0 0.0
    %2045 = vmatpush.msra.mxu0 0.0
    %2046 = vmatpush.msra.mxu0 0.0
    %2047 = vmatpush.msra.mxu0 0.0
    %2048 = vmatpush.msra.mxu0 %v2012
    %2049 = vmatmul.f32.gmra.mxu0 %v875
    %v2050 = vpop.f32.mrf.mxu0
    %v2051 = vadd.f32 0.0, %v2050
    %2052 = vdwg.mxu0
    %2053 = vset.pattern.permute.xlu0 3
    %2054 = vperm.xlu0 %2053, %v251
    %v2055 = vpop.permute.xlu0 %2054
    %2057 = vset.pattern.permute.xlu0 3
    %2058 = vperm.xlu0 %2057, %v252
    %v2059 = vpop.permute.xlu0 %2058
    %2061 = vset.pattern.permute.xlu0 3
    %2062 = vperm.xlu0 %2061, %v253
    %v2063 = vpop.permute.xlu0 %2062
    %2065 = vset.pattern.permute.xlu0 3
    %2066 = vperm.xlu0 %2065, %v254
    %v2067 = vpop.permute.xlu0 %2066
    %2069 = vset.pattern.permute.xlu0 3
    %2070 = vperm.xlu0 %2069, %v255
    %v2071 = vpop.permute.xlu0 %2070
    %2073 = vset.pattern.permute.xlu0 3
    %2074 = vperm.xlu0 %2073, %v256
    %v2075 = vpop.permute.xlu0 %2074
    %2077 = vset.pattern.permute.xlu0 3
    %2078 = vperm.xlu0 %2077, %v257
    %v2079 = vpop.permute.xlu0 %2078
    %2081 = vset.pattern.permute.xlu0 3
    %2082 = vperm.xlu0 %2081, %v258
    %v2083 = vpop.permute.xlu0 %2082
    %v2085 = vadd.f32 %v127, %v2055
    %v2086 = vadd.f32 %v168, %v2055
    %v2087 = vadd.f32 %v130, %v2059
    %v2088 = vadd.f32 %v171, %v2059
    %v2089 = vadd.f32 %v133, %v2063
    %v2090 = vadd.f32 %v174, %v2063
    %v2091 = vadd.f32 %v136, %v2067
    %v2092 = vadd.f32 %v177, %v2067
    %v2093 = vadd.f32 %v139, %v2071
    %v2094 = vadd.f32 %v180, %v2071
    %v2095 = vadd.f32 %v142, %v2075
    %v2096 = vadd.f32 %v183, %v2075
    %v2097 = vadd.f32 %v145, %v2079
    %v2098 = vadd.f32 %v186, %v2079
    %v2099 = vadd.f32 %v148, %v2083
    %v2100 = vadd.f32 %v189, %v2083
    %2101 = vmatpush.msra.mxu0 0.0
    %2102 = vmatpush.msra.mxu0 0.0
    %2103 = vmatpush.msra.mxu0 0.0
    %2104 = vmatpush.msra.mxu0 0.0
    %2105 = vmatpush.msra.mxu0 0.0
    %2106 = vmatpush.msra.mxu0 0.0
    %2107 = vmatpush.msra.mxu0 0.0
    %2108 = vmatpush.msra.mxu0 0.0
    %2109 = vmatpush.msra.mxu0 0.0
    %2110 = vmatpush.msra.mxu0 0.0
    %2111 = vmatpush.msra.mxu0 0.0
    %2112 = vmatpush.msra.mxu0 0.0
    %2113 = vmatpush.msra.mxu0 0.0
    %2114 = vmatpush.msra.mxu0 0.0
    %2115 = vmatpush.msra.mxu0 0.0
    %2116 = vmatpush.msra.mxu0 %v2031
    %2117 = vmatmul.f32.gmra.mxu0 %v316
    %v2118 = vpop.f32.mrf.mxu0
    %v2119 = vadd.f32 %v2085, %v2118
    %2120 = vmatmul.f32.gmra.mxu0 %v319
    %v2121 = vpop.f32.mrf.mxu0
    %v2122 = vadd.f32 %v2087, %v2121
    %2123 = vmatmul.f32.gmra.mxu0 %v322
    %v2124 = vpop.f32.mrf.mxu0
    %v2125 = vadd.f32 %v2089, %v2124
    %2126 = vmatmul.f32.gmra.mxu0 %v325
    %v2127 = vpop.f32.mrf.mxu0
    %v2128 = vadd.f32 %v2091, %v2127
    %2129 = vmatmul.f32.gmra.mxu0 %v328
    %v2130 = vpop.f32.mrf.mxu0
    %v2131 = vadd.f32 %v2093, %v2130
    %2132 = vmatmul.f32.gmra.mxu0 %v331
    %v2133 = vpop.f32.mrf.mxu0
    %v2134 = vadd.f32 %v2095, %v2133
    %2135 = vmatmul.f32.gmra.mxu0 %v334
    %v2136 = vpop.f32.mrf.mxu0
    %v2137 = vadd.f32 %v2097, %v2136
    %2138 = vmatmul.f32.gmra.mxu0 %v337
    %v2139 = vpop.f32.mrf.mxu0
    %v2140 = vadd.f32 %v2099, %v2139
    %2141 = vdwg.mxu0
    %2142 = vmatpush.msra.mxu0 0.0
    %2143 = vmatpush.msra.mxu0 0.0
    %2144 = vmatpush.msra.mxu0 0.0
    %2145 = vmatpush.msra.mxu0 0.0
    %2146 = vmatpush.msra.mxu0 0.0
    %2147 = vmatpush.msra.mxu0 0.0
    %2148 = vmatpush.msra.mxu0 0.0
    %2149 = vmatpush.msra.mxu0 0.0
    %2150 = vmatpush.msra.mxu0 0.0
    %2151 = vmatpush.msra.mxu0 0.0
    %2152 = vmatpush.msra.mxu0 0.0
    %2153 = vmatpush.msra.mxu0 0.0
    %2154 = vmatpush.msra.mxu0 0.0
    %2155 = vmatpush.msra.mxu0 0.0
    %2156 = vmatpush.msra.mxu0 0.0
    %2157 = vmatpush.msra.mxu0 %v2051
    %2158 = vmatmul.f32.gmra.mxu0 %v316
    %v2159 = vpop.f32.mrf.mxu0
    %v2160 = vadd.f32 %v2086, %v2159
    %2161 = vmatmul.f32.gmra.mxu0 %v319
    %v2162 = vpop.f32.mrf.mxu0
    %v2163 = vadd.f32 %v2088, %v2162
    %2164 = vmatmul.f32.gmra.mxu0 %v322
    %v2165 = vpop.f32.mrf.mxu0
    %v2166 = vadd.f32 %v2090, %v2165
    %2167 = vmatmul.f32.gmra.mxu0 %v325
    %v2168 = vpop.f32.mrf.mxu0
    %v2169 = vadd.f32 %v2092, %v2168
    %2170 = vmatmul.f32.gmra.mxu0 %v328
    %v2171 = vpop.f32.mrf.mxu0
    %v2172 = vadd.f32 %v2094, %v2171
    %2173 = vmatmul.f32.gmra.mxu0 %v331
    %v2174 = vpop.f32.mrf.mxu0
    %v2175 = vadd.f32 %v2096, %v2174
    %2176 = vmatmul.f32.gmra.mxu0 %v334
    %v2177 = vpop.f32.mrf.mxu0
    %v2178 = vadd.f32 %v2098, %v2177
    %2179 = vmatmul.f32.gmra.mxu0 %v337
    %v2180 = vpop.f32.mrf.mxu0
    %v2181 = vadd.f32 %v2100, %v2180
    %2182 = vdwg.mxu0
    %v2183 = vtanh.pop %v2119
    %v2184 = vtanh.pop %v2160
    %v2185 = vtanh.pop %v2122
    %v2186 = vtanh.pop %v2163
    %v2187 = vtanh.pop %v2125
    %v2188 = vtanh.pop %v2166
    %v2189 = vtanh.pop %v2128
    %v2190 = vtanh.pop %v2169
    %v2191 = vtanh.pop %v2131
    %v2192 = vtanh.pop %v2172
    %v2193 = vtanh.pop %v2134
    %v2194 = vtanh.pop %v2175
    %v2195 = vtanh.pop %v2137
    %v2196 = vtanh.pop %v2178
    %v2197 = vtanh.pop %v2140
    %v2198 = vtanh.pop %v2181
    %2199 = vmatpush.msra.mxu0 0.0
    %2200 = vmatpush.msra.mxu0 0.0
    %2201 = vmatpush.msra.mxu0 0.0
    %2202 = vmatpush.msra.mxu0 0.0
    %2203 = vmatpush.msra.mxu0 0.0
    %2204 = vmatpush.msra.mxu0 0.0
    %2205 = vmatpush.msra.mxu0 0.0
    %2206 = vmatpush.msra.mxu0 0.0
    %2207 = vmatpush.msra.mxu0 %v2197
    %2208 = vmatpush.msra.mxu0 %v2195
    %2209 = vmatpush.msra.mxu0 %v2193
    %2210 = vmatpush.msra.mxu0 %v2191
    %2211 = vmatpush.msra.mxu0 %v2189
    %2212 = vmatpush.msra.mxu0 %v2187
    %2213 = vmatpush.msra.mxu0 %v2185
    %2214 = vmatpush.msra.mxu0 %v2183
    %2215 = vmatmul.f32.gmra.mxu0 %v439
    %v2216 = vpop.f32.mrf.mxu0
    %v2217 = vadd.f32 %v202, %v2216
    %2218 = vmatmul.f32.gmra.mxu0 %v442
    %v2219 = vpop.f32.mrf.mxu0
    %v2220 = vadd.f32 %v207, %v2219
    %2221 = vmatmul.f32.gmra.mxu0 %v445
    %v2222 = vpop.f32.mrf.mxu0
    %v2223 = vadd.f32 %v212, %v2222
    %2224 = vmatmul.f32.gmra.mxu0 %v448
    %v2225 = vpop.f32.mrf.mxu0
    %v2226 = vadd.f32 %v217, %v2225
    %2227 = vmatmul.f32.gmra.mxu0 %v451
    %v2228 = vpop.f32.mrf.mxu0
    %v2229 = vadd.f32 %v222, %v2228
    %2230 = vmatmul.f32.gmra.mxu0 %v454
    %v2231 = vpop.f32.mrf.mxu0
    %v2232 = vadd.f32 %v227, %v2231
    %2233 = vmatmul.f32.gmra.mxu0 %v457
    %v2234 = vpop.f32.mrf.mxu0
    %v2235 = vadd.f32 %v232, %v2234
    %2236 = vmatmul.f32.gmra.mxu0 %v460
    %v2237 = vpop.f32.mrf.mxu0
    %v2238 = vadd.f32 %v237, %v2237
    %2239 = vdwg.mxu0
    %2240 = vmatpush.msra.mxu0 0.0
    %2241 = vmatpush.msra.mxu0 0.0
    %2242 = vmatpush.msra.mxu0 0.0
    %2243 = vmatpush.msra.mxu0 0.0
    %2244 = vmatpush.msra.mxu0 0.0
    %2245 = vmatpush.msra.mxu0 0.0
    %2246 = vmatpush.msra.mxu0 0.0
    %2247 = vmatpush.msra.mxu0 0.0
    %2248 = vmatpush.msra.mxu0 %v2198
    %2249 = vmatpush.msra.mxu0 %v2196
    %2250 = vmatpush.msra.mxu0 %v2194
    %2251 = vmatpush.msra.mxu0 %v2192
    %2252 = vmatpush.msra.mxu0 %v2190
    %2253 = vmatpush.msra.mxu0 %v2188
    %2254 = vmatpush.msra.mxu0 %v2186
    %2255 = vmatpush.msra.mxu0 %v2184
    %2256 = vmatmul.f32.gmra.mxu0 %v439
    %v2257 = vpop.f32.mrf.mxu0
    %v2258 = vadd.f32 %v202, %v2257
    %2259 = vmatmul.f32.gmra.mxu0 %v442
    %v2260 = vpop.f32.mrf.mxu0
    %v2261 = vadd.f32 %v207, %v2260
    %2262 = vmatmul.f32.gmra.mxu0 %v445
    %v2263 = vpop.f32.mrf.mxu0
    %v2264 = vadd.f32 %v212, %v2263
    %2265 = vmatmul.f32.gmra.mxu0 %v448
    %v2266 = vpop.f32.mrf.mxu0
    %v2267 = vadd.f32 %v217, %v2266
    %2268 = vmatmul.f32.gmra.mxu0 %v451
    %v2269 = vpop.f32.mrf.mxu0
    %v2270 = vadd.f32 %v222, %v2269
    %2271 = vmatmul.f32.gmra.mxu0 %v454
    %v2272 = vpop.f32.mrf.mxu0
    %v2273 = vadd.f32 %v227, %v2272
    %2274 = vmatmul.f32.gmra.mxu0 %v457
    %v2275 = vpop.f32.mrf.mxu0
    %v2276 = vadd.f32 %v232, %v2275
    %2277 = vmatmul.f32.gmra.mxu0 %v460
    %v2278 = vpop.f32.mrf.mxu0
    %v2279 = vadd.f32 %v237, %v2278
    %2280 = vdwg.mxu0
    %v2281 = vtanh.pop %v2217
    %v2282 = vtanh.pop %v2258
    %v2283 = vtanh.pop %v2220
    %v2284 = vtanh.pop %v2261
    %v2285 = vtanh.pop %v2223
    %v2286 = vtanh.pop %v2264
    %v2287 = vtanh.pop %v2226
    %v2288 = vtanh.pop %v2267
    %v2289 = vtanh.pop %v2229
    %v2290 = vtanh.pop %v2270
    %v2291 = vtanh.pop %v2232
    %v2292 = vtanh.pop %v2273
    %v2293 = vtanh.pop %v2235
    %v2294 = vtanh.pop %v2276
    %v2295 = vtanh.pop %v2238
    %v2296 = vtanh.pop %v2279
    %2297 = vmatpush.msra.mxu0 0.0
    %2298 = vmatpush.msra.mxu0 0.0
    %2299 = vmatpush.msra.mxu0 0.0
    %2300 = vmatpush.msra.mxu0 0.0
    %2301 = vmatpush.msra.mxu0 0.0
    %2302 = vmatpush.msra.mxu0 0.0
    %2303 = vmatpush.msra.mxu0 0.0
    %2304 = vmatpush.msra.mxu0 0.0
    %2305 = vmatpush.msra.mxu0 %v2295
    %2306 = vmatpush.msra.mxu0 %v2293
    %2307 = vmatpush.msra.mxu0 %v2291
    %2308 = vmatpush.msra.mxu0 %v2289
    %2309 = vmatpush.msra.mxu0 %v2287
    %2310 = vmatpush.msra.mxu0 %v2285
    %2311 = vmatpush.msra.mxu0 %v2283
    %2312 = vmatpush.msra.mxu0 %v2281
    %2313 = vmatmul.f32.gmra.mxu0 %v561
    %v2314 = vpop.f32.mrf.mxu0
    %v2315 = vadd.f32 0.0, %v2314
    %2316 = vdwg.mxu0
    %2317 = vmatpush.msra.mxu0 0.0
    %2318 = vmatpush.msra.mxu0 0.0
    %2319 = vmatpush.msra.mxu0 0.0
    %2320 = vmatpush.msra.mxu0 0.0
    %2321 = vmatpush.msra.mxu0 0.0
    %2322 = vmatpush.msra.mxu0 0.0
    %2323 = vmatpush.msra.mxu0 0.0
    %2324 = vmatpush.msra.mxu0 0.0
    %2325 = vmatpush.msra.mxu0 %v2296
    %2326 = vmatpush.msra.mxu0 %v2294
    %2327 = vmatpush.msra.mxu0 %v2292
    %2328 = vmatpush.msra.mxu0 %v2290
    %2329 = vmatpush.msra.mxu0 %v2288
    %2330 = vmatpush.msra.mxu0 %v2286
    %2331 = vmatpush.msra.mxu0 %v2284
    %2332 = vmatpush.msra.mxu0 %v2282
    %2333 = vmatmul.f32.gmra.mxu0 %v561
    %v2334 = vpop.f32.mrf.mxu0
    %v2335 = vadd.f32 0.0, %v2334
    %2336 = vdwg.mxu0
    %v2337 = vadd.f32 %v2031, %v2315
    %v2338 = vadd.f32 %v2051, %v2335
    %v2339 = vadd.f32 %v2337, %v243
    %v2340 = vadd.f32 %v2338, %v243
    %2341 = vmatpush.msra.mxu0 0.0
    %2342 = vmatpush.msra.mxu0 0.0
    %2343 = vmatpush.msra.mxu0 0.0
    %2344 = vmatpush.msra.mxu0 0.0
    %2345 = vmatpush.msra.mxu0 0.0
    %2346 = vmatpush.msra.mxu0 0.0
    %2347 = vmatpush.msra.mxu0 0.0
    %2348 = vmatpush.msra.mxu0 0.0
    %2349 = vmatpush.msra.mxu0 0.0
    %2350 = vmatpush.msra.mxu0 0.0
    %2351 = vmatpush.msra.mxu0 0.0
    %2352 = vmatpush.msra.mxu0 0.0
    %2353 = vmatpush.msra.mxu0 0.0
    %2354 = vmatpush.msra.mxu0 0.0
    %2355 = vmatpush.msra.mxu0 0.0
    %2356 = vmatpush.msra.mxu0 %v2339
    %2357 = vmatmul.f32.gmra.mxu0 %v608
    %v2358 = vpop.f32.mrf.mxu0
    %v2359 = vadd.f32 %v2085, %v2358
    %2360 = vmatmul.f32.gmra.mxu0 %v611
    %v2361 = vpop.f32.mrf.mxu0
    %v2362 = vadd.f32 %v2087, %v2361
    %2363 = vmatmul.f32.gmra.mxu0 %v614
    %v2364 = vpop.f32.mrf.mxu0
    %v2365 = vadd.f32 %v2089, %v2364
    %2366 = vmatmul.f32.gmra.mxu0 %v617
    %v2367 = vpop.f32.mrf.mxu0
    %v2368 = vadd.f32 %v2091, %v2367
    %2369 = vmatmul.f32.gmra.mxu0 %v620
    %v2370 = vpop.f32.mrf.mxu0
    %v2371 = vadd.f32 %v2093, %v2370
    %2372 = vmatmul.f32.gmra.mxu0 %v623
    %v2373 = vpop.f32.mrf.mxu0
    %v2374 = vadd.f32 %v2095, %v2373
    %2375 = vmatmul.f32.gmra.mxu0 %v626
    %v2376 = vpop.f32.mrf.mxu0
    %v2377 = vadd.f32 %v2097, %v2376
    %2378 = vmatmul.f32.gmra.mxu0 %v629
    %v2379 = vpop.f32.mrf.mxu0
    %v2380 = vadd.f32 %v2099, %v2379
    %2381 = vdwg.mxu0
    %2382 = vmatpush.msra.mxu0 0.0
    %2383 = vmatpush.msra.mxu0 0.0
    %2384 = vmatpush.msra.mxu0 0.0
    %2385 = vmatpush.msra.mxu0 0.0
    %2386 = vmatpush.msra.mxu0 0.0
    %2387 = vmatpush.msra.mxu0 0.0
    %2388 = vmatpush.msra.mxu0 0.0
    %2389 = vmatpush.msra.mxu0 0.0
    %2390 = vmatpush.msra.mxu0 0.0
    %2391 = vmatpush.msra.mxu0 0.0
    %2392 = vmatpush.msra.mxu0 0.0
    %2393 = vmatpush.msra.mxu0 0.0
    %2394 = vmatpush.msra.mxu0 0.0
    %2395 = vmatpush.msra.mxu0 0.0
    %2396 = vmatpush.msra.mxu0 0.0
    %2397 = vmatpush.msra.mxu0 %v2340
    %2398 = vmatmul.f32.gmra.mxu0 %v608
    %v2399 = vpop.f32.mrf.mxu0
    %v2400 = vadd.f32 %v2086, %v2399
    %2401 = vmatmul.f32.gmra.mxu0 %v611
    %v2402 = vpop.f32.mrf.mxu0
    %v2403 = vadd.f32 %v2088, %v2402
    %2404 = vmatmul.f32.gmra.mxu0 %v614
    %v2405 = vpop.f32.mrf.mxu0
    %v2406 = vadd.f32 %v2090, %v2405
    %2407 = vmatmul.f32.gmra.mxu0 %v617
    %v2408 = vpop.f32.mrf.mxu0
    %v2409 = vadd.f32 %v2092, %v2408
    %2410 = vmatmul.f32.gmra.mxu0 %v620
    %v2411 = vpop.f32.mrf.mxu0
    %v2412 = vadd.f32 %v2094, %v2411
    %2413 = vmatmul.f32.gmra.mxu0 %v623
    %v2414 = vpop.f32.mrf.mxu0
    %v2415 = vadd.f32 %v2096, %v2414
    %2416 = vmatmul.f32.gmra.mxu0 %v626
    %v2417 = vpop.f32.mrf.mxu0
    %v2418 = vadd.f32 %v2098, %v2417
    %2419 = vmatmul.f32.gmra.mxu0 %v629
    %v2420 = vpop.f32.mrf.mxu0
    %v2421 = vadd.f32 %v2100, %v2420
    %2422 = vdwg.mxu0
    %v2423 = vtanh.pop %v2359
    %v2424 = vtanh.pop %v2400
    %v2425 = vtanh.pop %v2362
    %v2426 = vtanh.pop %v2403
    %v2427 = vtanh.pop %v2365
    %v2428 = vtanh.pop %v2406
    %v2429 = vtanh.pop %v2368
    %v2430 = vtanh.pop %v2409
    %v2431 = vtanh.pop %v2371
    %v2432 = vtanh.pop %v2412
    %v2433 = vtanh.pop %v2374
    %v2434 = vtanh.pop %v2415
    %v2435 = vtanh.pop %v2377
    %v2436 = vtanh.pop %v2418
    %v2437 = vtanh.pop %v2380
    %v2438 = vtanh.pop %v2421
    %2439 = vmatpush.msra.mxu0 0.0
    %2440 = vmatpush.msra.mxu0 0.0
    %2441 = vmatpush.msra.mxu0 0.0
    %2442 = vmatpush.msra.mxu0 0.0
    %2443 = vmatpush.msra.mxu0 0.0
    %2444 = vmatpush.msra.mxu0 0.0
    %2445 = vmatpush.msra.mxu0 0.0
    %2446 = vmatpush.msra.mxu0 0.0
    %2447 = vmatpush.msra.mxu0 %v2437
    %2448 = vmatpush.msra.mxu0 %v2435
    %2449 = vmatpush.msra.mxu0 %v2433
    %2450 = vmatpush.msra.mxu0 %v2431
    %2451 = vmatpush.msra.mxu0 %v2429
    %2452 = vmatpush.msra.mxu0 %v2427
    %2453 = vmatpush.msra.mxu0 %v2425
    %2454 = vmatpush.msra.mxu0 %v2423
    %2455 = vmatmul.f32.gmra.mxu0 %v439
    %v2456 = vpop.f32.mrf.mxu0
    %v2457 = vadd.f32 %v202, %v2456
    %2458 = vmatmul.f32.gmra.mxu0 %v442
    %v2459 = vpop.f32.mrf.mxu0
    %v2460 = vadd.f32 %v207, %v2459
    %2461 = vmatmul.f32.gmra.mxu0 %v445
    %v2462 = vpop.f32.mrf.mxu0
    %v2463 = vadd.f32 %v212, %v2462
    %2464 = vmatmul.f32.gmra.mxu0 %v448
    %v2465 = vpop.f32.mrf.mxu0
    %v2466 = vadd.f32 %v217, %v2465
    %2467 = vmatmul.f32.gmra.mxu0 %v451
    %v2468 = vpop.f32.mrf.mxu0
    %v2469 = vadd.f32 %v222, %v2468
    %2470 = vmatmul.f32.gmra.mxu0 %v454
    %v2471 = vpop.f32.mrf.mxu0
    %v2472 = vadd.f32 %v227, %v2471
    %2473 = vmatmul.f32.gmra.mxu0 %v457
    %v2474 = vpop.f32.mrf.mxu0
    %v2475 = vadd.f32 %v232, %v2474
    %2476 = vmatmul.f32.gmra.mxu0 %v460
    %v2477 = vpop.f32.mrf.mxu0
    %v2478 = vadd.f32 %v237, %v2477
    %2479 = vdwg.mxu0
    %2480 = vmatpush.msra.mxu0 0.0
    %2481 = vmatpush.msra.mxu0 0.0
    %2482 = vmatpush.msra.mxu0 0.0
    %2483 = vmatpush.msra.mxu0 0.0
    %2484 = vmatpush.msra.mxu0 0.0
    %2485 = vmatpush.msra.mxu0 0.0
    %2486 = vmatpush.msra.mxu0 0.0
    %2487 = vmatpush.msra.mxu0 0.0
    %2488 = vmatpush.msra.mxu0 %v2438
    %2489 = vmatpush.msra.mxu0 %v2436
    %2490 = vmatpush.msra.mxu0 %v2434
    %2491 = vmatpush.msra.mxu0 %v2432
    %2492 = vmatpush.msra.mxu0 %v2430
    %2493 = vmatpush.msra.mxu0 %v2428
    %2494 = vmatpush.msra.mxu0 %v2426
    %2495 = vmatpush.msra.mxu0 %v2424
    %2496 = vmatmul.f32.gmra.mxu0 %v439
    %v2497 = vpop.f32.mrf.mxu0
    %v2498 = vadd.f32 %v202, %v2497
    %2499 = vmatmul.f32.gmra.mxu0 %v442
    %v2500 = vpop.f32.mrf.mxu0
    %v2501 = vadd.f32 %v207, %v2500
    %2502 = vmatmul.f32.gmra.mxu0 %v445
    %v2503 = vpop.f32.mrf.mxu0
    %v2504 = vadd.f32 %v212, %v2503
    %2505 = vmatmul.f32.gmra.mxu0 %v448
    %v2506 = vpop.f32.mrf.mxu0
    %v2507 = vadd.f32 %v217, %v2506
    %2508 = vmatmul.f32.gmra.mxu0 %v451
    %v2509 = vpop.f32.mrf.mxu0
    %v2510 = vadd.f32 %v222, %v2509
    %2511 = vmatmul.f32.gmra.mxu0 %v454
    %v2512 = vpop.f32.mrf.mxu0
    %v2513 = vadd.f32 %v227, %v2512
    %2514 = vmatmul.f32.gmra.mxu0 %v457
    %v2515 = vpop.f32.mrf.mxu0
    %v2516 = vadd.f32 %v232, %v2515
    %2517 = vmatmul.f32.gmra.mxu0 %v460
    %v2518 = vpop.f32.mrf.mxu0
    %v2519 = vadd.f32 %v237, %v2518
    %2520 = vdwg.mxu0
    %v2521 = vtanh.pop %v2457
    %v2522 = vtanh.pop %v2498
    %v2523 = vtanh.pop %v2460
    %v2524 = vtanh.pop %v2501
    %v2525 = vtanh.pop %v2463
    %v2526 = vtanh.pop %v2504
    %v2527 = vtanh.pop %v2466
    %v2528 = vtanh.pop %v2507
    %v2529 = vtanh.pop %v2469
    %v2530 = vtanh.pop %v2510
    %v2531 = vtanh.pop %v2472
    %v2532 = vtanh.pop %v2513
    %v2533 = vtanh.pop %v2475
    %v2534 = vtanh.pop %v2516
    %v2535 = vtanh.pop %v2478
    %v2536 = vtanh.pop %v2519
    %2537 = vmatpush.msra.mxu0 0.0
    %2538 = vmatpush.msra.mxu0 0.0
    %2539 = vmatpush.msra.mxu0 0.0
    %2540 = vmatpush.msra.mxu0 0.0
    %2541 = vmatpush.msra.mxu0 0.0
    %2542 = vmatpush.msra.mxu0 0.0
    %2543 = vmatpush.msra.mxu0 0.0
    %2544 = vmatpush.msra.mxu0 0.0
    %2545 = vmatpush.msra.mxu0 %v2535
    %2546 = vmatpush.msra.mxu0 %v2533
    %2547 = vmatpush.msra.mxu0 %v2531
    %2548 = vmatpush.msra.mxu0 %v2529
    %2549 = vmatpush.msra.mxu0 %v2527
    %2550 = vmatpush.msra.mxu0 %v2525
    %2551 = vmatpush.msra.mxu0 %v2523
    %2552 = vmatpush.msra.mxu0 %v2521
    %2553 = vmatmul.f32.gmra.mxu0 %v828
    %v2554 = vpop.f32.mrf.mxu0
    %v2555 = vadd.f32 0.0, %v2554
    %2556 = vdwg.mxu0
    %2557 = vmatpush.msra.mxu0 0.0
    %2558 = vmatpush.msra.mxu0 0.0
    %2559 = vmatpush.msra.mxu0 0.0
    %2560 = vmatpush.msra.mxu0 0.0
    %2561 = vmatpush.msra.mxu0 0.0
    %2562 = vmatpush.msra.mxu0 0.0
    %2563 = vmatpush.msra.mxu0 0.0
    %2564 = vmatpush.msra.mxu0 0.0
    %2565 = vmatpush.msra.mxu0 %v2536
    %2566 = vmatpush.msra.mxu0 %v2534
    %2567 = vmatpush.msra.mxu0 %v2532
    %2568 = vmatpush.msra.mxu0 %v2530
    %2569 = vmatpush.msra.mxu0 %v2528
    %2570 = vmatpush.msra.mxu0 %v2526
    %2571 = vmatpush.msra.mxu0 %v2524
    %2572 = vmatpush.msra.mxu0 %v2522
    %2573 = vmatmul.f32.gmra.mxu0 %v828
    %v2574 = vpop.f32.mrf.mxu0
    %v2575 = vadd.f32 0.0, %v2574
    %2576 = vdwg.mxu0
    %v2577 = vadd.f32 %v2339, %v2555
    %v2578 = vadd.f32 %v2340, %v2575
    %v2579 = vadd.f32 %v2577, %v249
    %v2580 = vadd.f32 %v2578, %v249
    %2581 = vmatpush.msra.mxu0 0.0
    %2582 = vmatpush.msra.mxu0 0.0
    %2583 = vmatpush.msra.mxu0 0.0
    %2584 = vmatpush.msra.mxu0 0.0
    %2585 = vmatpush.msra.mxu0 0.0
    %2586 = vmatpush.msra.mxu0 0.0
    %2587 = vmatpush.msra.mxu0 0.0
    %2588 = vmatpush.msra.mxu0 0.0
    %2589 = vmatpush.msra.mxu0 0.0
    %2590 = vmatpush.msra.mxu0 0.0
    %2591 = vmatpush.msra.mxu0 0.0
    %2592 = vmatpush.msra.mxu0 0.0
    %2593 = vmatpush.msra.mxu0 0.0
    %2594 = vmatpush.msra.mxu0 0.0
    %2595 = vmatpush.msra.mxu0 0.0
    %2596 = vmatpush.msra.mxu0 %v2579
    %2597 = vmatmul.f32.gmra.mxu0 %v875
    %v2598 = vpop.f32.mrf.mxu0
    %v2599 = vadd.f32 0.0, %v2598
    %2600 = vdwg.mxu0
    %2601 = vmatpush.msra.mxu0 0.0
    %2602 = vmatpush.msra.mxu0 0.0
    %2603 = vmatpush.msra.mxu0 0.0
    %2604 = vmatpush.msra.mxu0 0.0
    %2605 = vmatpush.msra.mxu0 0.0
    %2606 = vmatpush.msra.mxu0 0.0
    %2607 = vmatpush.msra.mxu0 0.0
    %2608 = vmatpush.msra.mxu0 0.0
    %2609 = vmatpush.msra.mxu0 0.0
    %2610 = vmatpush.msra.mxu0 0.0
    %2611 = vmatpush.msra.mxu0 0.0
    %2612 = vmatpush.msra.mxu0 0.0
    %2613 = vmatpush.msra.mxu0 0.0
    %2614 = vmatpush.msra.mxu0 0.0
    %2615 = vmatpush.msra.mxu0 0.0
    %2616 = vmatpush.msra.mxu0 %v2580
    %2617 = vmatmul.f32.gmra.mxu0 %v875
    %v2618 = vpop.f32.mrf.mxu0
    %v2619 = vadd.f32 0.0, %v2618
    %2620 = vdwg.mxu0
    %2621 = vst [vmem:[#allocation2] sm:$0xff] %v2599
    %2622 = vst [vmem:[#allocation2 + $0x8] sm:$0xff] %v2619
    // Predicated region
    $region54: #{tpu_custom_call.1} parent=1 // pred_check
      _
    $region55: #{tpu_custom_call.1} parent=1 // pred_check_branch
      %2624 = sbr.rel (0) target = $region57
    $region56: #{tpu_custom_call.1} parent=1 // pred_region
      %2626 = vsyncadd [#allocation3], 0
      %s2628 = sshll.u32 [#allocation2], 4
      %s2629 = int_to_ptr.vmem [resolvable:$true] %s2628
      %s2630 = sshll.u32 %s13, 4
      %s2631 = int_to_ptr.hbm [resolvable:$true] %s2630
      %2633 = dma.vmem_to_hbm [thread:$0]  %s2629, 256, %s2631, [#allocation3]
    $region57: #{tpu_custom_call.1} parent=1 // pred_fallthru
      _
    // Predicated region
    $region58: #{tpu_custom_call.1} parent=1 // pred_check
      _
    $region59: #{tpu_custom_call.1} parent=1 // pred_check_branch
      %2635 = sbr.rel (0) target = $region61
    $region60: #{tpu_custom_call.1} parent=1 // pred_region
      %2637 = dma.done [#allocation3], 256
    $region61: #{tpu_custom_call.1} parent=1 // pred_fallthru
      _
    %2638 = vsyncpa [#allocation3], 1

</llo_original>
